<compile_context>
chip_gen: v7x
topology: tpu7x:2x2x1
jax: 0.10.0
libtpu: 0.0.40
codegen_flags: <defaults>
</compile_context>

<pallas_src>
import functools

import jax
import jax.numpy as jnp
from jax.experimental import pallas as pl
from jax.experimental.pallas import tpu as pltpu


def _leaky(x, slope=0.1):
    # leaky_relu(x, 0.1) == max(x, 0.1*x)
    return jnp.maximum(x, slope * x)


def blocks_kernel(x_ref, mask_ref, w1_ref, w2_ref, b_ref, o_ref,
                  *, count, Cmid, Cout, W, HWp):
    """Whole `Blocks` stack for one batch sample.  grid = (N,).

    Shapes seen by the kernel (batch dim squeezed away):
      x_ref   : (C, HWp)                f32   stack input (C == Cout)
      mask_ref: (9, HWp)                f32   precomputed zero-padding edge masks
      w1_ref  : (count, Cmid, C)        bf16  1x1 conv weights, BN scale folded in
      w2_ref  : (count, 9, Cout, Cmid)  bf16  3x3 conv weights per tap, scale folded
      b_ref   : (count, Cmid+Cout, 1)   f32   folded BN biases (conv1 rows, then conv2)
      o_ref   : (Cout, HWp)             f32   final output
    """
    cur = x_ref[...]                                        # (C, HWp) f32, residual carrier
    masks = mask_ref[...]                                   # (9, HWp) f32
    biases = b_ref[...]                                     # (count, Cmid+Cout, 1) f32

    # Tap lane-shifts for a 3x3 conv with padding=1 on the flat p = h*W + w axis.
    shifts = tuple(dy * W + dx for dy in (-1, 0, 1) for dx in (-1, 0, 1))
    mrows = [masks[k:k + 1, :] for k in range(9)]           # hoisted out of the block loop

    for t in range(count):                                  # unrolled: count is static
        b1_t = biases[t, 0:Cmid, :]                         # (Cmid, 1)
        b2_t = biases[t, Cmid:Cmid + Cout, :]               # (Cout, 1)

        # ---- conv1: 1x1 conv == channel matmul + folded BN bias + leaky -----
        z1 = jnp.dot(w1_ref[t], cur.astype(jnp.bfloat16),
                     preferred_element_type=jnp.float32) + b1_t      # (Cmid, HWp)
        y1 = _leaky(z1)

        # ---- conv2: 3x3 conv (padding=1) as 9 matmul-accumulates ------------
        # tap (dy,dx): lane rotation by dy*W+dx + precomputed edge mask (== zero pad).
        acc = None
        for k, s in enumerate(shifts):
            shifted = y1 if s == 0 else pltpu.roll(y1, shift=(-s) % HWp, axis=1)
            tap = (mrows[k] * shifted).astype(jnp.bfloat16)          # (Cmid, HWp)
            d = jnp.dot(w2_ref[t, k], tap,
                        preferred_element_type=jnp.float32)          # (Cout, HWp)
            acc = d if acc is None else acc + d
        y2 = _leaky(acc + b2_t)

        # ---- residual add; stays in f32 vregs across the whole chain --------
        cur = cur + y2

    o_ref[...] = cur


def fold_block_params(c1w, g1, b1, m1, v1, c2w, g2, b2, m2, v2, eps=1e-5):
    """Fold eval-mode BN into conv weights / biases; per-tap layout for the 3x3."""
    s1 = g1 / jnp.sqrt(v1 + eps)
    s2 = g2 / jnp.sqrt(v2 + eps)
    w1 = c1w[:, :, 0, 0] * s1[:, None]                      # (Cmid, Cin)
    bb1 = b1 - m1 * s1                                      # (Cmid,)
    cout, cmid = c2w.shape[0], c2w.shape[1]
    w2 = c2w * s2[:, None, None, None]                      # (Cout, Cmid, 3, 3)
    w2 = jnp.transpose(w2, (2, 3, 0, 1)).reshape(9, cout, cmid)   # tap k = ky*3 + kx
    bb2 = b2 - m2 * s2                                      # (Cout,)
    return w1, bb1, w2, bb2


def blocks_pallas(x_nchw, block_params):
    """Forward of `Blocks` (count chained BasicBlocks).  x_nchw: (N, C, H, W)."""
    N, C, H, W = x_nchw.shape
    HW = H * W
    HWp = max(128, ((HW + 127) // 128) * 128)               # lane-dense last dim
    count = len(block_params)

    w1 = jnp.stack([p[0] for p in block_params]).astype(jnp.bfloat16)   # (cnt, Cmid, C)
    w2 = jnp.stack([p[2] for p in block_params]).astype(jnp.bfloat16)   # (cnt, 9, Cout, Cmid)
    b1 = jnp.stack([p[1] for p in block_params]).astype(jnp.float32)    # (cnt, Cmid)
    b2 = jnp.stack([p[3] for p in block_params]).astype(jnp.float32)    # (cnt, Cout)
    bias = jnp.concatenate([b1, b2], axis=1)[..., None]                 # (cnt, Cmid+Cout, 1)

    Cmid = w1.shape[1]
    Cout = w2.shape[2]
    assert Cout == C, "residual add requires ch_in == 2 * ch_out"
    assert w2.shape[1] == 9 and w2.shape[3] == Cmid

    # NCHW in, only a contiguous reshape (no transpose); zero-pad the lane axis.
    x = x_nchw.reshape(N, C, HW).astype(jnp.float32)
    if HWp != HW:
        x = jnp.pad(x, ((0, 0), (0, 0), (0, HWp - HW)))

    # Precomputed edge masks (implement the conv zero padding + zero the pad lanes).
    flat = jnp.arange(HWp, dtype=jnp.int32)
    hh = flat // W
    ww = flat % W
    mask_rows = []
    for dy in (-1, 0, 1):
        for dx in (-1, 0, 1):
            ok = ((flat < HW) & (hh + dy >= 0) & (hh + dy < H)
                  & (ww + dx >= 0) & (ww + dx < W))
            mask_rows.append(ok)
    masks = jnp.stack(mask_rows, axis=0).astype(jnp.float32)            # (9, HWp)

    # VMEM budget derived from actual block sizes (+ headroom for temporaries).
    vmem_bytes = (
        2 * (C + Cout) * HWp * 4          # x / out blocks, double-buffered
        + 9 * HWp * 4                     # masks
        + (w1.size + w2.size) * 2         # bf16 weights (resident once)
        + bias.size * 4
        + 24 * max(C, Cmid, Cout) * HWp * 4   # in-kernel temporaries headroom
    )
    vmem_limit = int(max(2 * vmem_bytes, 4 * 1024 * 1024))

    out = pl.pallas_call(
        functools.partial(blocks_kernel, count=count, Cmid=Cmid, Cout=Cout,
                          W=W, HWp=HWp),
        out_shape=jax.ShapeDtypeStruct((N, Cout, HWp), jnp.float32),
        grid=(N,),
        in_specs=[
            pl.BlockSpec((None, C, HWp), lambda n: (n, 0, 0)),
            pl.BlockSpec((9, HWp), lambda n: (0, 0)),
            pl.BlockSpec((count, Cmid, C), lambda n: (0, 0, 0)),
            pl.BlockSpec((count, 9, Cout, Cmid), lambda n: (0, 0, 0, 0)),
            pl.BlockSpec((count, Cmid + Cout, 1), lambda n: (0, 0, 0)),
        ],
        out_specs=pl.BlockSpec((None, Cout, HWp), lambda n: (n, 0, 0)),
        compiler_params=pltpu.CompilerParams(
            dimension_semantics=("parallel",),
            vmem_limit_bytes=vmem_limit,
        ),
    )(x, masks, w1, w2, bias)

    return out[:, :, :HW].reshape(N, Cout, H, W)            # NCHW out


def reference_blocks_nchw(x, raw_params, eps=1e-5):
    """Pure-JAX reference matching the PyTorch `Blocks` module (eval-mode BN)."""
    def bn(z, g, b, m, v):
        s = (g / jnp.sqrt(v + eps))[None, :, None, None]
        return (z - m[None, :, None, None]) * s + b[None, :, None, None]

    y = x
    for (c1w, g1, b1, m1, v1, c2w, g2, b2, m2, v2) in raw_params:
        t = jax.lax.conv_general_dilated(y, c1w, (1, 1), 'VALID',
                                         dimension_numbers=('NCHW', 'OIHW', 'NCHW'))
        t = _leaky(bn(t, g1, b1, m1, v1))
        t2 = jax.lax.conv_general_dilated(t, c2w, (1, 1), ((1, 1), (1, 1)),
                                          dimension_numbers=('NCHW', 'OIHW', 'NCHW'))
        t2 = _leaky(bn(t2, g2, b2, m2, v2))
        y = y + t2
    return y


if __name__ == "__main__":
    key = jax.random.PRNGKey(0)
    ch_out = 4
    ch_in = 2 * ch_out          # Blocks/BasicBlock residual requires ch_in == 2*ch_out
    count = 3
    N, H, W = 2, 16, 16

    keys = iter(jax.random.split(key, 1 + 10 * count))
    x = jax.random.normal(next(keys), (N, ch_in, H, W), jnp.float32)

    raw_params = []
    for _ in range(count):
        c1w = jax.random.normal(next(keys), (ch_out, ch_in, 1, 1), jnp.float32) * 0.2
        g1 = 1.0 + 0.1 * jax.random.normal(next(keys), (ch_out,), jnp.float32)
        be1 = 0.1 * jax.random.normal(next(keys), (ch_out,), jnp.float32)
        m1 = 0.1 * jax.random.normal(next(keys), (ch_out,), jnp.float32)
        v1 = jax.random.uniform(next(keys), (ch_out,), jnp.float32, 0.5, 1.5)

        c2w = jax.random.normal(next(keys), (2 * ch_out, ch_out, 3, 3), jnp.float32) * 0.2
        g2 = 1.0 + 0.1 * jax.random.normal(next(keys), (2 * ch_out,), jnp.float32)
        be2 = 0.1 * jax.random.normal(next(keys), (2 * ch_out,), jnp.float32)
        m2 = 0.1 * jax.random.normal(next(keys), (2 * ch_out,), jnp.float32)
        v2 = jax.random.uniform(next(keys), (2 * ch_out,), jnp.float32, 0.5, 1.5)
        raw_params.append((c1w, g1, be1, m1, v1, c2w, g2, be2, m2, v2))

    folded = [fold_block_params(*p) for p in raw_params]

    out = blocks_pallas(x, folded)
    out = jax.block_until_ready(out)

    ref = reference_blocks_nchw(x, raw_params)
    assert out.shape == (N, ch_in, H, W)
    err = float(jnp.max(jnp.abs(out - ref)))
    assert err < 8e-2, err      # bf16 MXU inputs -> relaxed vs pure-f32 reference

    print("KERNEL_OK")
</pallas_src>

<mosaic_0001>
module attributes {stable_mosaic.version = 11 : i64} {
  func.func @blocks_kernel(%arg0: i32, %arg1: memref<1x8x256xf32, #tpu.memory_space<vmem>>, %arg2: memref<9x256xf32, #tpu.memory_space<vmem>>, %arg3: memref<3x4x8xbf16, #tpu.memory_space<vmem>>, %arg4: memref<3x9x8x4xbf16, #tpu.memory_space<vmem>>, %arg5: memref<3x12x1xf32, #tpu.memory_space<vmem>>, %arg6: memref<1x8x256xf32, #tpu.memory_space<vmem>>) attributes {dimension_semantics = [#tpu.dimension_semantics<parallel>], iteration_bounds = array<i64: 2>, scalar_prefetch = 0 : i64, scratch_operands = 0 : i64, tpu.core_type = #tpu.core_type<tc>, window_params = [{transform_indices = @transform_0, window_bounds = array<i64: 1, 8, 256>}, {pipeline_mode = #tpu.pipeline_mode<synchronous>, transform_indices = @transform_1, window_bounds = array<i64: 9, 256>}, {pipeline_mode = #tpu.pipeline_mode<synchronous>, transform_indices = @transform_2, window_bounds = array<i64: 3, 4, 8>}, {pipeline_mode = #tpu.pipeline_mode<synchronous>, transform_indices = @transform_3, window_bounds = array<i64: 3, 9, 8, 4>}, {pipeline_mode = #tpu.pipeline_mode<synchronous>, transform_indices = @transform_4, window_bounds = array<i64: 3, 12, 1>}, {transform_indices = @transform_5, window_bounds = array<i64: 1, 8, 256>}]} {
    %c0 = arith.constant 0 : index
    %c0_0 = arith.constant 0 : index
    %c0_1 = arith.constant 0 : index
    %0 = vector.load %arg1[%c0, %c0_0, %c0_1] : memref<1x8x256xf32, #tpu.memory_space<vmem>>, vector<1x8x256xf32>
    %1 = vector.shape_cast %0 : vector<1x8x256xf32> to vector<8x256xf32>
    %c0_2 = arith.constant 0 : index
    %c0_3 = arith.constant 0 : index
    %2 = vector.load %arg2[%c0_2, %c0_3] : memref<9x256xf32, #tpu.memory_space<vmem>>, vector<9x256xf32>
    %c0_4 = arith.constant 0 : index
    %c0_5 = arith.constant 0 : index
    %c0_6 = arith.constant 0 : index
    %3 = vector.load %arg5[%c0_4, %c0_5, %c0_6] : memref<3x12x1xf32, #tpu.memory_space<vmem>>, vector<3x12x1xf32>
    %4 = vector.extract_strided_slice %2 {offsets = [0, 0], sizes = [1, 256], strides = [1, 1]} : vector<9x256xf32> to vector<1x256xf32>
    %5 = vector.extract_strided_slice %2 {offsets = [1, 0], sizes = [1, 256], strides = [1, 1]} : vector<9x256xf32> to vector<1x256xf32>
    %6 = vector.extract_strided_slice %2 {offsets = [2, 0], sizes = [1, 256], strides = [1, 1]} : vector<9x256xf32> to vector<1x256xf32>
    %7 = vector.extract_strided_slice %2 {offsets = [3, 0], sizes = [1, 256], strides = [1, 1]} : vector<9x256xf32> to vector<1x256xf32>
    %8 = vector.extract_strided_slice %2 {offsets = [4, 0], sizes = [1, 256], strides = [1, 1]} : vector<9x256xf32> to vector<1x256xf32>
    %9 = vector.extract_strided_slice %2 {offsets = [5, 0], sizes = [1, 256], strides = [1, 1]} : vector<9x256xf32> to vector<1x256xf32>
    %10 = vector.extract_strided_slice %2 {offsets = [6, 0], sizes = [1, 256], strides = [1, 1]} : vector<9x256xf32> to vector<1x256xf32>
    %11 = vector.extract_strided_slice %2 {offsets = [7, 0], sizes = [1, 256], strides = [1, 1]} : vector<9x256xf32> to vector<1x256xf32>
    %12 = vector.extract_strided_slice %2 {offsets = [8, 0], sizes = [1, 256], strides = [1, 1]} : vector<9x256xf32> to vector<1x256xf32>
    %13 = vector.extract_strided_slice %3 {offsets = [0, 0, 0], sizes = [1, 4, 1], strides = [1, 1, 1]} : vector<3x12x1xf32> to vector<1x4x1xf32>
    %14 = vector.shape_cast %13 : vector<1x4x1xf32> to vector<4x1xf32>
    %15 = vector.extract_strided_slice %3 {offsets = [0, 4, 0], sizes = [1, 8, 1], strides = [1, 1, 1]} : vector<3x12x1xf32> to vector<1x8x1xf32>
    %16 = vector.shape_cast %15 : vector<1x8x1xf32> to vector<8x1xf32>
    %c0_7 = arith.constant 0 : index
    %c0_8 = arith.constant 0 : index
    %c0_9 = arith.constant 0 : index
    %17 = vector.load %arg3[%c0_7, %c0_8, %c0_9] : memref<3x4x8xbf16, #tpu.memory_space<vmem>>, vector<1x4x8xbf16>
    %18 = vector.shape_cast %17 : vector<1x4x8xbf16> to vector<4x8xbf16>
    %19 = arith.truncf %1 : vector<8x256xf32> to vector<8x256xbf16>
    %cst = arith.constant dense<0.000000e+00> : vector<4x256xf32>
    %20 = tpu.matmul %18, %19, %cst {dimension_numbers = #tpu.dot_dimension_numbers<[1], [0], [0], [1], [0, 0, 1, 1], [], []>} : vector<4x8xbf16>, vector<8x256xbf16>, vector<4x256xf32> -> vector<4x256xf32>
    %21 = vector.broadcast %14 : vector<4x1xf32> to vector<4x256xf32>
    %22 = arith.addf %20, %21 : vector<4x256xf32>
    %cst_10 = arith.constant 1.000000e-01 : f32
    %23 = vector.broadcast %cst_10 : f32 to vector<4x256xf32>
    %24 = arith.mulf %23, %22 : vector<4x256xf32>
    %25 = arith.maximumf %22, %24 : vector<4x256xf32>
    %c17_i32 = arith.constant 17 : i32
    %26 = tpu.dynamic_rotate %25 by %c17_i32 dim 1 : vector<4x256xf32>, i32 -> vector<4x256xf32>
    %27 = vector.broadcast %4 : vector<1x256xf32> to vector<4x256xf32>
    %28 = arith.mulf %27, %26 : vector<4x256xf32>
    %29 = arith.truncf %28 : vector<4x256xf32> to vector<4x256xbf16>
    %c0_11 = arith.constant 0 : index
    %c0_12 = arith.constant 0 : index
    %c0_13 = arith.constant 0 : index
    %c0_14 = arith.constant 0 : index
    %30 = vector.load %arg4[%c0_11, %c0_12, %c0_13, %c0_14] : memref<3x9x8x4xbf16, #tpu.memory_space<vmem>>, vector<1x1x8x4xbf16>
    %31 = vector.shape_cast %30 : vector<1x1x8x4xbf16> to vector<8x4xbf16>
    %cst_15 = arith.constant dense<0.000000e+00> : vector<8x256xf32>
    %32 = tpu.matmul %31, %29, %cst_15 {dimension_numbers = #tpu.dot_dimension_numbers<[1], [0], [0], [1], [0, 0, 1, 1], [], []>} : vector<8x4xbf16>, vector<4x256xbf16>, vector<8x256xf32> -> vector<8x256xf32>
    %c16_i32 = arith.constant 16 : i32
    %33 = tpu.dynamic_rotate %25 by %c16_i32 dim 1 : vector<4x256xf32>, i32 -> vector<4x256xf32>
    %34 = vector.broadcast %5 : vector<1x256xf32> to vector<4x256xf32>
    %35 = arith.mulf %34, %33 : vector<4x256xf32>
    %36 = arith.truncf %35 : vector<4x256xf32> to vector<4x256xbf16>
    %c0_16 = arith.constant 0 : index
    %c1 = arith.constant 1 : index
    %c0_17 = arith.constant 0 : index
    %c0_18 = arith.constant 0 : index
    %37 = vector.load %arg4[%c0_16, %c1, %c0_17, %c0_18] : memref<3x9x8x4xbf16, #tpu.memory_space<vmem>>, vector<1x1x8x4xbf16>
    %38 = vector.shape_cast %37 : vector<1x1x8x4xbf16> to vector<8x4xbf16>
    %cst_19 = arith.constant dense<0.000000e+00> : vector<8x256xf32>
    %39 = tpu.matmul %38, %36, %cst_19 {dimension_numbers = #tpu.dot_dimension_numbers<[1], [0], [0], [1], [0, 0, 1, 1], [], []>} : vector<8x4xbf16>, vector<4x256xbf16>, vector<8x256xf32> -> vector<8x256xf32>
    %40 = arith.addf %32, %39 : vector<8x256xf32>
    %c15_i32 = arith.constant 15 : i32
    %41 = tpu.dynamic_rotate %25 by %c15_i32 dim 1 : vector<4x256xf32>, i32 -> vector<4x256xf32>
    %42 = vector.broadcast %6 : vector<1x256xf32> to vector<4x256xf32>
    %43 = arith.mulf %42, %41 : vector<4x256xf32>
    %44 = arith.truncf %43 : vector<4x256xf32> to vector<4x256xbf16>
    %c0_20 = arith.constant 0 : index
    %c2 = arith.constant 2 : index
    %c0_21 = arith.constant 0 : index
    %c0_22 = arith.constant 0 : index
    %45 = vector.load %arg4[%c0_20, %c2, %c0_21, %c0_22] : memref<3x9x8x4xbf16, #tpu.memory_space<vmem>>, vector<1x1x8x4xbf16>
    %46 = vector.shape_cast %45 : vector<1x1x8x4xbf16> to vector<8x4xbf16>
    %cst_23 = arith.constant dense<0.000000e+00> : vector<8x256xf32>
    %47 = tpu.matmul %46, %44, %cst_23 {dimension_numbers = #tpu.dot_dimension_numbers<[1], [0], [0], [1], [0, 0, 1, 1], [], []>} : vector<8x4xbf16>, vector<4x256xbf16>, vector<8x256xf32> -> vector<8x256xf32>
    %48 = arith.addf %40, %47 : vector<8x256xf32>
    %c1_i32 = arith.constant 1 : i32
    %49 = tpu.dynamic_rotate %25 by %c1_i32 dim 1 : vector<4x256xf32>, i32 -> vector<4x256xf32>
    %50 = vector.broadcast %7 : vector<1x256xf32> to vector<4x256xf32>
    %51 = arith.mulf %50, %49 : vector<4x256xf32>
    %52 = arith.truncf %51 : vector<4x256xf32> to vector<4x256xbf16>
    %c0_24 = arith.constant 0 : index
    %c3 = arith.constant 3 : index
    %c0_25 = arith.constant 0 : index
    %c0_26 = arith.constant 0 : index
    %53 = vector.load %arg4[%c0_24, %c3, %c0_25, %c0_26] : memref<3x9x8x4xbf16, #tpu.memory_space<vmem>>, vector<1x1x8x4xbf16>
    %54 = vector.shape_cast %53 : vector<1x1x8x4xbf16> to vector<8x4xbf16>
    %cst_27 = arith.constant dense<0.000000e+00> : vector<8x256xf32>
    %55 = tpu.matmul %54, %52, %cst_27 {dimension_numbers = #tpu.dot_dimension_numbers<[1], [0], [0], [1], [0, 0, 1, 1], [], []>} : vector<8x4xbf16>, vector<4x256xbf16>, vector<8x256xf32> -> vector<8x256xf32>
    %56 = arith.addf %48, %55 : vector<8x256xf32>
    %57 = vector.broadcast %8 : vector<1x256xf32> to vector<4x256xf32>
    %58 = arith.mulf %57, %25 : vector<4x256xf32>
    %59 = arith.truncf %58 : vector<4x256xf32> to vector<4x256xbf16>
    %c0_28 = arith.constant 0 : index
    %c4 = arith.constant 4 : index
    %c0_29 = arith.constant 0 : index
    %c0_30 = arith.constant 0 : index
    %60 = vector.load %arg4[%c0_28, %c4, %c0_29, %c0_30] : memref<3x9x8x4xbf16, #tpu.memory_space<vmem>>, vector<1x1x8x4xbf16>
    %61 = vector.shape_cast %60 : vector<1x1x8x4xbf16> to vector<8x4xbf16>
    %cst_31 = arith.constant dense<0.000000e+00> : vector<8x256xf32>
    %62 = tpu.matmul %61, %59, %cst_31 {dimension_numbers = #tpu.dot_dimension_numbers<[1], [0], [0], [1], [0, 0, 1, 1], [], []>} : vector<8x4xbf16>, vector<4x256xbf16>, vector<8x256xf32> -> vector<8x256xf32>
    %63 = arith.addf %56, %62 : vector<8x256xf32>
    %c255_i32 = arith.constant 255 : i32
    %64 = tpu.dynamic_rotate %25 by %c255_i32 dim 1 : vector<4x256xf32>, i32 -> vector<4x256xf32>
    %65 = vector.broadcast %9 : vector<1x256xf32> to vector<4x256xf32>
    %66 = arith.mulf %65, %64 : vector<4x256xf32>
    %67 = arith.truncf %66 : vector<4x256xf32> to vector<4x256xbf16>
    %c0_32 = arith.constant 0 : index
    %c5 = arith.constant 5 : index
    %c0_33 = arith.constant 0 : index
    %c0_34 = arith.constant 0 : index
    %68 = vector.load %arg4[%c0_32, %c5, %c0_33, %c0_34] : memref<3x9x8x4xbf16, #tpu.memory_space<vmem>>, vector<1x1x8x4xbf16>
    %69 = vector.shape_cast %68 : vector<1x1x8x4xbf16> to vector<8x4xbf16>
    %cst_35 = arith.constant dense<0.000000e+00> : vector<8x256xf32>
    %70 = tpu.matmul %69, %67, %cst_35 {dimension_numbers = #tpu.dot_dimension_numbers<[1], [0], [0], [1], [0, 0, 1, 1], [], []>} : vector<8x4xbf16>, vector<4x256xbf16>, vector<8x256xf32> -> vector<8x256xf32>
    %71 = arith.addf %63, %70 : vector<8x256xf32>
    %c241_i32 = arith.constant 241 : i32
    %72 = tpu.dynamic_rotate %25 by %c241_i32 dim 1 : vector<4x256xf32>, i32 -> vector<4x256xf32>
    %73 = vector.broadcast %10 : vector<1x256xf32> to vector<4x256xf32>
    %74 = arith.mulf %73, %72 : vector<4x256xf32>
    %75 = arith.truncf %74 : vector<4x256xf32> to vector<4x256xbf16>
    %c0_36 = arith.constant 0 : index
    %c6 = arith.constant 6 : index
    %c0_37 = arith.constant 0 : index
    %c0_38 = arith.constant 0 : index
    %76 = vector.load %arg4[%c0_36, %c6, %c0_37, %c0_38] : memref<3x9x8x4xbf16, #tpu.memory_space<vmem>>, vector<1x1x8x4xbf16>
    %77 = vector.shape_cast %76 : vector<1x1x8x4xbf16> to vector<8x4xbf16>
    %cst_39 = arith.constant dense<0.000000e+00> : vector<8x256xf32>
    %78 = tpu.matmul %77, %75, %cst_39 {dimension_numbers = #tpu.dot_dimension_numbers<[1], [0], [0], [1], [0, 0, 1, 1], [], []>} : vector<8x4xbf16>, vector<4x256xbf16>, vector<8x256xf32> -> vector<8x256xf32>
    %79 = arith.addf %71, %78 : vector<8x256xf32>
    %c240_i32 = arith.constant 240 : i32
    %80 = tpu.dynamic_rotate %25 by %c240_i32 dim 1 : vector<4x256xf32>, i32 -> vector<4x256xf32>
    %81 = vector.broadcast %11 : vector<1x256xf32> to vector<4x256xf32>
    %82 = arith.mulf %81, %80 : vector<4x256xf32>
    %83 = arith.truncf %82 : vector<4x256xf32> to vector<4x256xbf16>
    %c0_40 = arith.constant 0 : index
    %c7 = arith.constant 7 : index
    %c0_41 = arith.constant 0 : index
    %c0_42 = arith.constant 0 : index
    %84 = vector.load %arg4[%c0_40, %c7, %c0_41, %c0_42] : memref<3x9x8x4xbf16, #tpu.memory_space<vmem>>, vector<1x1x8x4xbf16>
    %85 = vector.shape_cast %84 : vector<1x1x8x4xbf16> to vector<8x4xbf16>
    %cst_43 = arith.constant dense<0.000000e+00> : vector<8x256xf32>
    %86 = tpu.matmul %85, %83, %cst_43 {dimension_numbers = #tpu.dot_dimension_numbers<[1], [0], [0], [1], [0, 0, 1, 1], [], []>} : vector<8x4xbf16>, vector<4x256xbf16>, vector<8x256xf32> -> vector<8x256xf32>
    %87 = arith.addf %79, %86 : vector<8x256xf32>
    %c239_i32 = arith.constant 239 : i32
    %88 = tpu.dynamic_rotate %25 by %c239_i32 dim 1 : vector<4x256xf32>, i32 -> vector<4x256xf32>
    %89 = vector.broadcast %12 : vector<1x256xf32> to vector<4x256xf32>
    %90 = arith.mulf %89, %88 : vector<4x256xf32>
    %91 = arith.truncf %90 : vector<4x256xf32> to vector<4x256xbf16>
    %c0_44 = arith.constant 0 : index
    %c8 = arith.constant 8 : index
    %c0_45 = arith.constant 0 : index
    %c0_46 = arith.constant 0 : index
    %92 = vector.load %arg4[%c0_44, %c8, %c0_45, %c0_46] : memref<3x9x8x4xbf16, #tpu.memory_space<vmem>>, vector<1x1x8x4xbf16>
    %93 = vector.shape_cast %92 : vector<1x1x8x4xbf16> to vector<8x4xbf16>
    %cst_47 = arith.constant dense<0.000000e+00> : vector<8x256xf32>
    %94 = tpu.matmul %93, %91, %cst_47 {dimension_numbers = #tpu.dot_dimension_numbers<[1], [0], [0], [1], [0, 0, 1, 1], [], []>} : vector<8x4xbf16>, vector<4x256xbf16>, vector<8x256xf32> -> vector<8x256xf32>
    %95 = arith.addf %87, %94 : vector<8x256xf32>
    %96 = vector.broadcast %16 : vector<8x1xf32> to vector<8x256xf32>
    %97 = arith.addf %95, %96 : vector<8x256xf32>
    %cst_48 = arith.constant 1.000000e-01 : f32
    %98 = vector.broadcast %cst_48 : f32 to vector<8x256xf32>
    %99 = arith.mulf %98, %97 : vector<8x256xf32>
    %100 = arith.maximumf %97, %99 : vector<8x256xf32>
    %101 = arith.addf %1, %100 : vector<8x256xf32>
    %102 = vector.extract_strided_slice %3 {offsets = [1, 0, 0], sizes = [1, 4, 1], strides = [1, 1, 1]} : vector<3x12x1xf32> to vector<1x4x1xf32>
    %103 = vector.shape_cast %102 : vector<1x4x1xf32> to vector<4x1xf32>
    %104 = vector.extract_strided_slice %3 {offsets = [1, 4, 0], sizes = [1, 8, 1], strides = [1, 1, 1]} : vector<3x12x1xf32> to vector<1x8x1xf32>
    %105 = vector.shape_cast %104 : vector<1x8x1xf32> to vector<8x1xf32>
    %c1_49 = arith.constant 1 : index
    %c0_50 = arith.constant 0 : index
    %c0_51 = arith.constant 0 : index
    %106 = vector.load %arg3[%c1_49, %c0_50, %c0_51] : memref<3x4x8xbf16, #tpu.memory_space<vmem>>, vector<1x4x8xbf16>
    %107 = vector.shape_cast %106 : vector<1x4x8xbf16> to vector<4x8xbf16>
    %108 = arith.truncf %101 : vector<8x256xf32> to vector<8x256xbf16>
    %cst_52 = arith.constant dense<0.000000e+00> : vector<4x256xf32>
    %109 = tpu.matmul %107, %108, %cst_52 {dimension_numbers = #tpu.dot_dimension_numbers<[1], [0], [0], [1], [0, 0, 1, 1], [], []>} : vector<4x8xbf16>, vector<8x256xbf16>, vector<4x256xf32> -> vector<4x256xf32>
    %110 = vector.broadcast %103 : vector<4x1xf32> to vector<4x256xf32>
    %111 = arith.addf %109, %110 : vector<4x256xf32>
    %cst_53 = arith.constant 1.000000e-01 : f32
    %112 = vector.broadcast %cst_53 : f32 to vector<4x256xf32>
    %113 = arith.mulf %112, %111 : vector<4x256xf32>
    %114 = arith.maximumf %111, %113 : vector<4x256xf32>
    %c17_i32_54 = arith.constant 17 : i32
    %115 = tpu.dynamic_rotate %114 by %c17_i32_54 dim 1 : vector<4x256xf32>, i32 -> vector<4x256xf32>
    %116 = vector.broadcast %4 : vector<1x256xf32> to vector<4x256xf32>
    %117 = arith.mulf %116, %115 : vector<4x256xf32>
    %118 = arith.truncf %117 : vector<4x256xf32> to vector<4x256xbf16>
    %c1_55 = arith.constant 1 : index
    %c0_56 = arith.constant 0 : index
    %c0_57 = arith.constant 0 : index
    %c0_58 = arith.constant 0 : index
    %119 = vector.load %arg4[%c1_55, %c0_56, %c0_57, %c0_58] : memref<3x9x8x4xbf16, #tpu.memory_space<vmem>>, vector<1x1x8x4xbf16>
    %120 = vector.shape_cast %119 : vector<1x1x8x4xbf16> to vector<8x4xbf16>
    %cst_59 = arith.constant dense<0.000000e+00> : vector<8x256xf32>
    %121 = tpu.matmul %120, %118, %cst_59 {dimension_numbers = #tpu.dot_dimension_numbers<[1], [0], [0], [1], [0, 0, 1, 1], [], []>} : vector<8x4xbf16>, vector<4x256xbf16>, vector<8x256xf32> -> vector<8x256xf32>
    %c16_i32_60 = arith.constant 16 : i32
    %122 = tpu.dynamic_rotate %114 by %c16_i32_60 dim 1 : vector<4x256xf32>, i32 -> vector<4x256xf32>
    %123 = vector.broadcast %5 : vector<1x256xf32> to vector<4x256xf32>
    %124 = arith.mulf %123, %122 : vector<4x256xf32>
    %125 = arith.truncf %124 : vector<4x256xf32> to vector<4x256xbf16>
    %c1_61 = arith.constant 1 : index
    %c1_62 = arith.constant 1 : index
    %c0_63 = arith.constant 0 : index
    %c0_64 = arith.constant 0 : index
    %126 = vector.load %arg4[%c1_61, %c1_62, %c0_63, %c0_64] : memref<3x9x8x4xbf16, #tpu.memory_space<vmem>>, vector<1x1x8x4xbf16>
    %127 = vector.shape_cast %126 : vector<1x1x8x4xbf16> to vector<8x4xbf16>
    %cst_65 = arith.constant dense<0.000000e+00> : vector<8x256xf32>
    %128 = tpu.matmul %127, %125, %cst_65 {dimension_numbers = #tpu.dot_dimension_numbers<[1], [0], [0], [1], [0, 0, 1, 1], [], []>} : vector<8x4xbf16>, vector<4x256xbf16>, vector<8x256xf32> -> vector<8x256xf32>
    %129 = arith.addf %121, %128 : vector<8x256xf32>
    %c15_i32_66 = arith.constant 15 : i32
    %130 = tpu.dynamic_rotate %114 by %c15_i32_66 dim 1 : vector<4x256xf32>, i32 -> vector<4x256xf32>
    %131 = vector.broadcast %6 : vector<1x256xf32> to vector<4x256xf32>
    %132 = arith.mulf %131, %130 : vector<4x256xf32>
    %133 = arith.truncf %132 : vector<4x256xf32> to vector<4x256xbf16>
    %c1_67 = arith.constant 1 : index
    %c2_68 = arith.constant 2 : index
    %c0_69 = arith.constant 0 : index
    %c0_70 = arith.constant 0 : index
    %134 = vector.load %arg4[%c1_67, %c2_68, %c0_69, %c0_70] : memref<3x9x8x4xbf16, #tpu.memory_space<vmem>>, vector<1x1x8x4xbf16>
    %135 = vector.shape_cast %134 : vector<1x1x8x4xbf16> to vector<8x4xbf16>
    %cst_71 = arith.constant dense<0.000000e+00> : vector<8x256xf32>
    %136 = tpu.matmul %135, %133, %cst_71 {dimension_numbers = #tpu.dot_dimension_numbers<[1], [0], [0], [1], [0, 0, 1, 1], [], []>} : vector<8x4xbf16>, vector<4x256xbf16>, vector<8x256xf32> -> vector<8x256xf32>
    %137 = arith.addf %129, %136 : vector<8x256xf32>
    %c1_i32_72 = arith.constant 1 : i32
    %138 = tpu.dynamic_rotate %114 by %c1_i32_72 dim 1 : vector<4x256xf32>, i32 -> vector<4x256xf32>
    %139 = vector.broadcast %7 : vector<1x256xf32> to vector<4x256xf32>
    %140 = arith.mulf %139, %138 : vector<4x256xf32>
    %141 = arith.truncf %140 : vector<4x256xf32> to vector<4x256xbf16>
    %c1_73 = arith.constant 1 : index
    %c3_74 = arith.constant 3 : index
    %c0_75 = arith.constant 0 : index
    %c0_76 = arith.constant 0 : index
    %142 = vector.load %arg4[%c1_73, %c3_74, %c0_75, %c0_76] : memref<3x9x8x4xbf16, #tpu.memory_space<vmem>>, vector<1x1x8x4xbf16>
    %143 = vector.shape_cast %142 : vector<1x1x8x4xbf16> to vector<8x4xbf16>
    %cst_77 = arith.constant dense<0.000000e+00> : vector<8x256xf32>
    %144 = tpu.matmul %143, %141, %cst_77 {dimension_numbers = #tpu.dot_dimension_numbers<[1], [0], [0], [1], [0, 0, 1, 1], [], []>} : vector<8x4xbf16>, vector<4x256xbf16>, vector<8x256xf32> -> vector<8x256xf32>
    %145 = arith.addf %137, %144 : vector<8x256xf32>
    %146 = vector.broadcast %8 : vector<1x256xf32> to vector<4x256xf32>
    %147 = arith.mulf %146, %114 : vector<4x256xf32>
    %148 = arith.truncf %147 : vector<4x256xf32> to vector<4x256xbf16>
    %c1_78 = arith.constant 1 : index
    %c4_79 = arith.constant 4 : index
    %c0_80 = arith.constant 0 : index
    %c0_81 = arith.constant 0 : index
    %149 = vector.load %arg4[%c1_78, %c4_79, %c0_80, %c0_81] : memref<3x9x8x4xbf16, #tpu.memory_space<vmem>>, vector<1x1x8x4xbf16>
    %150 = vector.shape_cast %149 : vector<1x1x8x4xbf16> to vector<8x4xbf16>
    %cst_82 = arith.constant dense<0.000000e+00> : vector<8x256xf32>
    %151 = tpu.matmul %150, %148, %cst_82 {dimension_numbers = #tpu.dot_dimension_numbers<[1], [0], [0], [1], [0, 0, 1, 1], [], []>} : vector<8x4xbf16>, vector<4x256xbf16>, vector<8x256xf32> -> vector<8x256xf32>
    %152 = arith.addf %145, %151 : vector<8x256xf32>
    %c255_i32_83 = arith.constant 255 : i32
    %153 = tpu.dynamic_rotate %114 by %c255_i32_83 dim 1 : vector<4x256xf32>, i32 -> vector<4x256xf32>
    %154 = vector.broadcast %9 : vector<1x256xf32> to vector<4x256xf32>
    %155 = arith.mulf %154, %153 : vector<4x256xf32>
    %156 = arith.truncf %155 : vector<4x256xf32> to vector<4x256xbf16>
    %c1_84 = arith.constant 1 : index
    %c5_85 = arith.constant 5 : index
    %c0_86 = arith.constant 0 : index
    %c0_87 = arith.constant 0 : index
    %157 = vector.load %arg4[%c1_84, %c5_85, %c0_86, %c0_87] : memref<3x9x8x4xbf16, #tpu.memory_space<vmem>>, vector<1x1x8x4xbf16>
    %158 = vector.shape_cast %157 : vector<1x1x8x4xbf16> to vector<8x4xbf16>
    %cst_88 = arith.constant dense<0.000000e+00> : vector<8x256xf32>
    %159 = tpu.matmul %158, %156, %cst_88 {dimension_numbers = #tpu.dot_dimension_numbers<[1], [0], [0], [1], [0, 0, 1, 1], [], []>} : vector<8x4xbf16>, vector<4x256xbf16>, vector<8x256xf32> -> vector<8x256xf32>
    %160 = arith.addf %152, %159 : vector<8x256xf32>
    %c241_i32_89 = arith.constant 241 : i32
    %161 = tpu.dynamic_rotate %114 by %c241_i32_89 dim 1 : vector<4x256xf32>, i32 -> vector<4x256xf32>
    %162 = vector.broadcast %10 : vector<1x256xf32> to vector<4x256xf32>
    %163 = arith.mulf %162, %161 : vector<4x256xf32>
    %164 = arith.truncf %163 : vector<4x256xf32> to vector<4x256xbf16>
    %c1_90 = arith.constant 1 : index
    %c6_91 = arith.constant 6 : index
    %c0_92 = arith.constant 0 : index
    %c0_93 = arith.constant 0 : index
    %165 = vector.load %arg4[%c1_90, %c6_91, %c0_92, %c0_93] : memref<3x9x8x4xbf16, #tpu.memory_space<vmem>>, vector<1x1x8x4xbf16>
    %166 = vector.shape_cast %165 : vector<1x1x8x4xbf16> to vector<8x4xbf16>
    %cst_94 = arith.constant dense<0.000000e+00> : vector<8x256xf32>
    %167 = tpu.matmul %166, %164, %cst_94 {dimension_numbers = #tpu.dot_dimension_numbers<[1], [0], [0], [1], [0, 0, 1, 1], [], []>} : vector<8x4xbf16>, vector<4x256xbf16>, vector<8x256xf32> -> vector<8x256xf32>
    %168 = arith.addf %160, %167 : vector<8x256xf32>
    %c240_i32_95 = arith.constant 240 : i32
    %169 = tpu.dynamic_rotate %114 by %c240_i32_95 dim 1 : vector<4x256xf32>, i32 -> vector<4x256xf32>
    %170 = vector.broadcast %11 : vector<1x256xf32> to vector<4x256xf32>
    %171 = arith.mulf %170, %169 : vector<4x256xf32>
    %172 = arith.truncf %171 : vector<4x256xf32> to vector<4x256xbf16>
    %c1_96 = arith.constant 1 : index
    %c7_97 = arith.constant 7 : index
    %c0_98 = arith.constant 0 : index
    %c0_99 = arith.constant 0 : index
    %173 = vector.load %arg4[%c1_96, %c7_97, %c0_98, %c0_99] : memref<3x9x8x4xbf16, #tpu.memory_space<vmem>>, vector<1x1x8x4xbf16>
    %174 = vector.shape_cast %173 : vector<1x1x8x4xbf16> to vector<8x4xbf16>
    %cst_100 = arith.constant dense<0.000000e+00> : vector<8x256xf32>
    %175 = tpu.matmul %174, %172, %cst_100 {dimension_numbers = #tpu.dot_dimension_numbers<[1], [0], [0], [1], [0, 0, 1, 1], [], []>} : vector<8x4xbf16>, vector<4x256xbf16>, vector<8x256xf32> -> vector<8x256xf32>
    %176 = arith.addf %168, %175 : vector<8x256xf32>
    %c239_i32_101 = arith.constant 239 : i32
    %177 = tpu.dynamic_rotate %114 by %c239_i32_101 dim 1 : vector<4x256xf32>, i32 -> vector<4x256xf32>
    %178 = vector.broadcast %12 : vector<1x256xf32> to vector<4x256xf32>
    %179 = arith.mulf %178, %177 : vector<4x256xf32>
    %180 = arith.truncf %179 : vector<4x256xf32> to vector<4x256xbf16>
    %c1_102 = arith.constant 1 : index
    %c8_103 = arith.constant 8 : index
    %c0_104 = arith.constant 0 : index
    %c0_105 = arith.constant 0 : index
    %181 = vector.load %arg4[%c1_102, %c8_103, %c0_104, %c0_105] : memref<3x9x8x4xbf16, #tpu.memory_space<vmem>>, vector<1x1x8x4xbf16>
    %182 = vector.shape_cast %181 : vector<1x1x8x4xbf16> to vector<8x4xbf16>
    %cst_106 = arith.constant dense<0.000000e+00> : vector<8x256xf32>
    %183 = tpu.matmul %182, %180, %cst_106 {dimension_numbers = #tpu.dot_dimension_numbers<[1], [0], [0], [1], [0, 0, 1, 1], [], []>} : vector<8x4xbf16>, vector<4x256xbf16>, vector<8x256xf32> -> vector<8x256xf32>
    %184 = arith.addf %176, %183 : vector<8x256xf32>
    %185 = vector.broadcast %105 : vector<8x1xf32> to vector<8x256xf32>
    %186 = arith.addf %184, %185 : vector<8x256xf32>
    %cst_107 = arith.constant 1.000000e-01 : f32
    %187 = vector.broadcast %cst_107 : f32 to vector<8x256xf32>
    %188 = arith.mulf %187, %186 : vector<8x256xf32>
    %189 = arith.maximumf %186, %188 : vector<8x256xf32>
    %190 = arith.addf %101, %189 : vector<8x256xf32>
    %191 = vector.extract_strided_slice %3 {offsets = [2, 0, 0], sizes = [1, 4, 1], strides = [1, 1, 1]} : vector<3x12x1xf32> to vector<1x4x1xf32>
    %192 = vector.shape_cast %191 : vector<1x4x1xf32> to vector<4x1xf32>
    %193 = vector.extract_strided_slice %3 {offsets = [2, 4, 0], sizes = [1, 8, 1], strides = [1, 1, 1]} : vector<3x12x1xf32> to vector<1x8x1xf32>
    %194 = vector.shape_cast %193 : vector<1x8x1xf32> to vector<8x1xf32>
    %c2_108 = arith.constant 2 : index
    %c0_109 = arith.constant 0 : index
    %c0_110 = arith.constant 0 : index
    %195 = vector.load %arg3[%c2_108, %c0_109, %c0_110] : memref<3x4x8xbf16, #tpu.memory_space<vmem>>, vector<1x4x8xbf16>
    %196 = vector.shape_cast %195 : vector<1x4x8xbf16> to vector<4x8xbf16>
    %197 = arith.truncf %190 : vector<8x256xf32> to vector<8x256xbf16>
    %cst_111 = arith.constant dense<0.000000e+00> : vector<4x256xf32>
    %198 = tpu.matmul %196, %197, %cst_111 {dimension_numbers = #tpu.dot_dimension_numbers<[1], [0], [0], [1], [0, 0, 1, 1], [], []>} : vector<4x8xbf16>, vector<8x256xbf16>, vector<4x256xf32> -> vector<4x256xf32>
    %199 = vector.broadcast %192 : vector<4x1xf32> to vector<4x256xf32>
    %200 = arith.addf %198, %199 : vector<4x256xf32>
    %cst_112 = arith.constant 1.000000e-01 : f32
    %201 = vector.broadcast %cst_112 : f32 to vector<4x256xf32>
    %202 = arith.mulf %201, %200 : vector<4x256xf32>
    %203 = arith.maximumf %200, %202 : vector<4x256xf32>
    %c17_i32_113 = arith.constant 17 : i32
    %204 = tpu.dynamic_rotate %203 by %c17_i32_113 dim 1 : vector<4x256xf32>, i32 -> vector<4x256xf32>
    %205 = vector.broadcast %4 : vector<1x256xf32> to vector<4x256xf32>
    %206 = arith.mulf %205, %204 : vector<4x256xf32>
    %207 = arith.truncf %206 : vector<4x256xf32> to vector<4x256xbf16>
    %c2_114 = arith.constant 2 : index
    %c0_115 = arith.constant 0 : index
    %c0_116 = arith.constant 0 : index
    %c0_117 = arith.constant 0 : index
    %208 = vector.load %arg4[%c2_114, %c0_115, %c0_116, %c0_117] : memref<3x9x8x4xbf16, #tpu.memory_space<vmem>>, vector<1x1x8x4xbf16>
    %209 = vector.shape_cast %208 : vector<1x1x8x4xbf16> to vector<8x4xbf16>
    %cst_118 = arith.constant dense<0.000000e+00> : vector<8x256xf32>
    %210 = tpu.matmul %209, %207, %cst_118 {dimension_numbers = #tpu.dot_dimension_numbers<[1], [0], [0], [1], [0, 0, 1, 1], [], []>} : vector<8x4xbf16>, vector<4x256xbf16>, vector<8x256xf32> -> vector<8x256xf32>
    %c16_i32_119 = arith.constant 16 : i32
    %211 = tpu.dynamic_rotate %203 by %c16_i32_119 dim 1 : vector<4x256xf32>, i32 -> vector<4x256xf32>
    %212 = vector.broadcast %5 : vector<1x256xf32> to vector<4x256xf32>
    %213 = arith.mulf %212, %211 : vector<4x256xf32>
    %214 = arith.truncf %213 : vector<4x256xf32> to vector<4x256xbf16>
    %c2_120 = arith.constant 2 : index
    %c1_121 = arith.constant 1 : index
    %c0_122 = arith.constant 0 : index
    %c0_123 = arith.constant 0 : index
    %215 = vector.load %arg4[%c2_120, %c1_121, %c0_122, %c0_123] : memref<3x9x8x4xbf16, #tpu.memory_space<vmem>>, vector<1x1x8x4xbf16>
    %216 = vector.shape_cast %215 : vector<1x1x8x4xbf16> to vector<8x4xbf16>
    %cst_124 = arith.constant dense<0.000000e+00> : vector<8x256xf32>
    %217 = tpu.matmul %216, %214, %cst_124 {dimension_numbers = #tpu.dot_dimension_numbers<[1], [0], [0], [1], [0, 0, 1, 1], [], []>} : vector<8x4xbf16>, vector<4x256xbf16>, vector<8x256xf32> -> vector<8x256xf32>
    %218 = arith.addf %210, %217 : vector<8x256xf32>
    %c15_i32_125 = arith.constant 15 : i32
    %219 = tpu.dynamic_rotate %203 by %c15_i32_125 dim 1 : vector<4x256xf32>, i32 -> vector<4x256xf32>
    %220 = vector.broadcast %6 : vector<1x256xf32> to vector<4x256xf32>
    %221 = arith.mulf %220, %219 : vector<4x256xf32>
    %222 = arith.truncf %221 : vector<4x256xf32> to vector<4x256xbf16>
    %c2_126 = arith.constant 2 : index
    %c2_127 = arith.constant 2 : index
    %c0_128 = arith.constant 0 : index
    %c0_129 = arith.constant 0 : index
    %223 = vector.load %arg4[%c2_126, %c2_127, %c0_128, %c0_129] : memref<3x9x8x4xbf16, #tpu.memory_space<vmem>>, vector<1x1x8x4xbf16>
    %224 = vector.shape_cast %223 : vector<1x1x8x4xbf16> to vector<8x4xbf16>
    %cst_130 = arith.constant dense<0.000000e+00> : vector<8x256xf32>
    %225 = tpu.matmul %224, %222, %cst_130 {dimension_numbers = #tpu.dot_dimension_numbers<[1], [0], [0], [1], [0, 0, 1, 1], [], []>} : vector<8x4xbf16>, vector<4x256xbf16>, vector<8x256xf32> -> vector<8x256xf32>
    %226 = arith.addf %218, %225 : vector<8x256xf32>
    %c1_i32_131 = arith.constant 1 : i32
    %227 = tpu.dynamic_rotate %203 by %c1_i32_131 dim 1 : vector<4x256xf32>, i32 -> vector<4x256xf32>
    %228 = vector.broadcast %7 : vector<1x256xf32> to vector<4x256xf32>
    %229 = arith.mulf %228, %227 : vector<4x256xf32>
    %230 = arith.truncf %229 : vector<4x256xf32> to vector<4x256xbf16>
    %c2_132 = arith.constant 2 : index
    %c3_133 = arith.constant 3 : index
    %c0_134 = arith.constant 0 : index
    %c0_135 = arith.constant 0 : index
    %231 = vector.load %arg4[%c2_132, %c3_133, %c0_134, %c0_135] : memref<3x9x8x4xbf16, #tpu.memory_space<vmem>>, vector<1x1x8x4xbf16>
    %232 = vector.shape_cast %231 : vector<1x1x8x4xbf16> to vector<8x4xbf16>
    %cst_136 = arith.constant dense<0.000000e+00> : vector<8x256xf32>
    %233 = tpu.matmul %232, %230, %cst_136 {dimension_numbers = #tpu.dot_dimension_numbers<[1], [0], [0], [1], [0, 0, 1, 1], [], []>} : vector<8x4xbf16>, vector<4x256xbf16>, vector<8x256xf32> -> vector<8x256xf32>
    %234 = arith.addf %226, %233 : vector<8x256xf32>
    %235 = vector.broadcast %8 : vector<1x256xf32> to vector<4x256xf32>
    %236 = arith.mulf %235, %203 : vector<4x256xf32>
    %237 = arith.truncf %236 : vector<4x256xf32> to vector<4x256xbf16>
    %c2_137 = arith.constant 2 : index
    %c4_138 = arith.constant 4 : index
    %c0_139 = arith.constant 0 : index
    %c0_140 = arith.constant 0 : index
    %238 = vector.load %arg4[%c2_137, %c4_138, %c0_139, %c0_140] : memref<3x9x8x4xbf16, #tpu.memory_space<vmem>>, vector<1x1x8x4xbf16>
    %239 = vector.shape_cast %238 : vector<1x1x8x4xbf16> to vector<8x4xbf16>
    %cst_141 = arith.constant dense<0.000000e+00> : vector<8x256xf32>
    %240 = tpu.matmul %239, %237, %cst_141 {dimension_numbers = #tpu.dot_dimension_numbers<[1], [0], [0], [1], [0, 0, 1, 1], [], []>} : vector<8x4xbf16>, vector<4x256xbf16>, vector<8x256xf32> -> vector<8x256xf32>
    %241 = arith.addf %234, %240 : vector<8x256xf32>
    %c255_i32_142 = arith.constant 255 : i32
    %242 = tpu.dynamic_rotate %203 by %c255_i32_142 dim 1 : vector<4x256xf32>, i32 -> vector<4x256xf32>
    %243 = vector.broadcast %9 : vector<1x256xf32> to vector<4x256xf32>
    %244 = arith.mulf %243, %242 : vector<4x256xf32>
    %245 = arith.truncf %244 : vector<4x256xf32> to vector<4x256xbf16>
    %c2_143 = arith.constant 2 : index
    %c5_144 = arith.constant 5 : index
    %c0_145 = arith.constant 0 : index
    %c0_146 = arith.constant 0 : index
    %246 = vector.load %arg4[%c2_143, %c5_144, %c0_145, %c0_146] : memref<3x9x8x4xbf16, #tpu.memory_space<vmem>>, vector<1x1x8x4xbf16>
    %247 = vector.shape_cast %246 : vector<1x1x8x4xbf16> to vector<8x4xbf16>
    %cst_147 = arith.constant dense<0.000000e+00> : vector<8x256xf32>
    %248 = tpu.matmul %247, %245, %cst_147 {dimension_numbers = #tpu.dot_dimension_numbers<[1], [0], [0], [1], [0, 0, 1, 1], [], []>} : vector<8x4xbf16>, vector<4x256xbf16>, vector<8x256xf32> -> vector<8x256xf32>
    %249 = arith.addf %241, %248 : vector<8x256xf32>
    %c241_i32_148 = arith.constant 241 : i32
    %250 = tpu.dynamic_rotate %203 by %c241_i32_148 dim 1 : vector<4x256xf32>, i32 -> vector<4x256xf32>
    %251 = vector.broadcast %10 : vector<1x256xf32> to vector<4x256xf32>
    %252 = arith.mulf %251, %250 : vector<4x256xf32>
    %253 = arith.truncf %252 : vector<4x256xf32> to vector<4x256xbf16>
    %c2_149 = arith.constant 2 : index
    %c6_150 = arith.constant 6 : index
    %c0_151 = arith.constant 0 : index
    %c0_152 = arith.constant 0 : index
    %254 = vector.load %arg4[%c2_149, %c6_150, %c0_151, %c0_152] : memref<3x9x8x4xbf16, #tpu.memory_space<vmem>>, vector<1x1x8x4xbf16>
    %255 = vector.shape_cast %254 : vector<1x1x8x4xbf16> to vector<8x4xbf16>
    %cst_153 = arith.constant dense<0.000000e+00> : vector<8x256xf32>
    %256 = tpu.matmul %255, %253, %cst_153 {dimension_numbers = #tpu.dot_dimension_numbers<[1], [0], [0], [1], [0, 0, 1, 1], [], []>} : vector<8x4xbf16>, vector<4x256xbf16>, vector<8x256xf32> -> vector<8x256xf32>
    %257 = arith.addf %249, %256 : vector<8x256xf32>
    %c240_i32_154 = arith.constant 240 : i32
    %258 = tpu.dynamic_rotate %203 by %c240_i32_154 dim 1 : vector<4x256xf32>, i32 -> vector<4x256xf32>
    %259 = vector.broadcast %11 : vector<1x256xf32> to vector<4x256xf32>
    %260 = arith.mulf %259, %258 : vector<4x256xf32>
    %261 = arith.truncf %260 : vector<4x256xf32> to vector<4x256xbf16>
    %c2_155 = arith.constant 2 : index
    %c7_156 = arith.constant 7 : index
    %c0_157 = arith.constant 0 : index
    %c0_158 = arith.constant 0 : index
    %262 = vector.load %arg4[%c2_155, %c7_156, %c0_157, %c0_158] : memref<3x9x8x4xbf16, #tpu.memory_space<vmem>>, vector<1x1x8x4xbf16>
    %263 = vector.shape_cast %262 : vector<1x1x8x4xbf16> to vector<8x4xbf16>
    %cst_159 = arith.constant dense<0.000000e+00> : vector<8x256xf32>
    %264 = tpu.matmul %263, %261, %cst_159 {dimension_numbers = #tpu.dot_dimension_numbers<[1], [0], [0], [1], [0, 0, 1, 1], [], []>} : vector<8x4xbf16>, vector<4x256xbf16>, vector<8x256xf32> -> vector<8x256xf32>
    %265 = arith.addf %257, %264 : vector<8x256xf32>
    %c239_i32_160 = arith.constant 239 : i32
    %266 = tpu.dynamic_rotate %203 by %c239_i32_160 dim 1 : vector<4x256xf32>, i32 -> vector<4x256xf32>
    %267 = vector.broadcast %12 : vector<1x256xf32> to vector<4x256xf32>
    %268 = arith.mulf %267, %266 : vector<4x256xf32>
    %269 = arith.truncf %268 : vector<4x256xf32> to vector<4x256xbf16>
    %c2_161 = arith.constant 2 : index
    %c8_162 = arith.constant 8 : index
    %c0_163 = arith.constant 0 : index
    %c0_164 = arith.constant 0 : index
    %270 = vector.load %arg4[%c2_161, %c8_162, %c0_163, %c0_164] : memref<3x9x8x4xbf16, #tpu.memory_space<vmem>>, vector<1x1x8x4xbf16>
    %271 = vector.shape_cast %270 : vector<1x1x8x4xbf16> to vector<8x4xbf16>
    %cst_165 = arith.constant dense<0.000000e+00> : vector<8x256xf32>
    %272 = tpu.matmul %271, %269, %cst_165 {dimension_numbers = #tpu.dot_dimension_numbers<[1], [0], [0], [1], [0, 0, 1, 1], [], []>} : vector<8x4xbf16>, vector<4x256xbf16>, vector<8x256xf32> -> vector<8x256xf32>
    %273 = arith.addf %265, %272 : vector<8x256xf32>
    %274 = vector.broadcast %194 : vector<8x1xf32> to vector<8x256xf32>
    %275 = arith.addf %273, %274 : vector<8x256xf32>
    %cst_166 = arith.constant 1.000000e-01 : f32
    %276 = vector.broadcast %cst_166 : f32 to vector<8x256xf32>
    %277 = arith.mulf %276, %275 : vector<8x256xf32>
    %278 = arith.maximumf %275, %277 : vector<8x256xf32>
    %279 = arith.addf %190, %278 : vector<8x256xf32>
    %c0_167 = arith.constant 0 : index
    %c0_168 = arith.constant 0 : index
    %c0_169 = arith.constant 0 : index
    %280 = vector.load %arg6[%c0_167, %c0_168, %c0_169] : memref<1x8x256xf32, #tpu.memory_space<vmem>>, vector<1x8x256xf32>
    %281 = vector.shape_cast %280 : vector<1x8x256xf32> to vector<8x256xf32>
    %282 = vector.shape_cast %279 : vector<8x256xf32> to vector<1x8x256xf32>
    tpu.vector_store %arg6[%c0_167, %c0_168, %c0_169], %282 {strides = array<i32>} : memref<1x8x256xf32, #tpu.memory_space<vmem>>, vector<1x8x256xf32>,
    return
  }
  func.func @transform_0(%arg0: i32) -> (i32, i32, i32) {
    %c0_i32 = arith.constant 0 : i32
    %c0_i32_0 = arith.constant 0 : i32
    %c0_i32_1 = arith.constant 0 : i32
    return %arg0, %c0_i32, %c0_i32_0 : i32, i32, i32
  }
  func.func @transform_1(%arg0: i32) -> (i32, i32) {
    %c0_i32 = arith.constant 0 : i32
    %c0_i32_0 = arith.constant 0 : i32
    %c0_i32_1 = arith.constant 0 : i32
    return %c0_i32, %c0_i32_0 : i32, i32
  }
  func.func @transform_2(%arg0: i32) -> (i32, i32, i32) {
    %c0_i32 = arith.constant 0 : i32
    %c0_i32_0 = arith.constant 0 : i32
    %c0_i32_1 = arith.constant 0 : i32
    %c0_i32_2 = arith.constant 0 : i32
    return %c0_i32, %c0_i32_0, %c0_i32_1 : i32, i32, i32
  }
  func.func @transform_3(%arg0: i32) -> (i32, i32, i32, i32) {
    %c0_i32 = arith.constant 0 : i32
    %c0_i32_0 = arith.constant 0 : i32
    %c0_i32_1 = arith.constant 0 : i32
    %c0_i32_2 = arith.constant 0 : i32
    %c0_i32_3 = arith.constant 0 : i32
    return %c0_i32, %c0_i32_0, %c0_i32_1, %c0_i32_2 : i32, i32, i32, i32
  }
  func.func @transform_4(%arg0: i32) -> (i32, i32, i32) {
    %c0_i32 = arith.constant 0 : i32
    %c0_i32_0 = arith.constant 0 : i32
    %c0_i32_1 = arith.constant 0 : i32
    %c0_i32_2 = arith.constant 0 : i32
    return %c0_i32, %c0_i32_0, %c0_i32_1 : i32, i32, i32
  }
  func.func @transform_5(%arg0: i32) -> (i32, i32, i32) {
    %c0_i32 = arith.constant 0 : i32
    %c0_i32_0 = arith.constant 0 : i32
    %c0_i32_1 = arith.constant 0 : i32
    return %arg0, %c0_i32, %c0_i32_0 : i32, i32, i32
  }
}

</mosaic_0001>

<llo_original>
// kernel: tpu_custom_call.1
$region0: #{tpu_custom_call.1}
  #allocation0 [shape = 'u32[]', space=smem, size = 0x4, offset = 0x4, fixed_abs, tag = 'smem constant byte address 0x4 - core index']
  #allocation1 [shape = 'u32[144,128]{1,0:T(1,128)}', space=vmem, size = 0x12000, scoped, tag = 'internal scratch']
  %s0 = inlined_call_operand.vmem [shape: f32[2,8,256], index: 0, kind: input, shape index: {}]
  %s1 = inlined_call_operand.vmem [shape: f32[9,256], index: 1, kind: input, shape index: {}]
  %s2 = inlined_call_operand.vmem [shape: bf16[3,4,8], index: 2, kind: input, shape index: {}]
  %s3 = inlined_call_operand.vmem [shape: bf16[3,9,8,4], index: 3, kind: input, shape index: {}]
  %s4 = inlined_call_operand.vmem [shape: f32[3,12,1], index: 4, kind: input, shape index: {}]
  %s5 = inlined_call_operand.hbm [shape: f32[2,8,256], index: 5, kind: output, shape index: {}]
  %s6 = sld [smem:[#allocation0]]
  $region53: #{tpu_custom_call.1} parent=0
    _
  %s8 = ssub.s32 1, %s6
  %s9 = scalar_select 0, %s8, %s6
  $region1: #{tpu_custom_call.1} parent=0
    #allocation2 [shape = 'u8[16384]{0}', space=vmem, size = 0x4000, scoped, tag = 'output window, operand 0']
    #allocation3 [shape = 's32[2]{0}', space=sflag, size = 0x8, scoped, tag = 'scoped memory for tpu_custom_call.1']
    %10 = vsyncpa [#allocation3], 0
    %s11 = scalar_lea.sflag [#allocation3], 1
    %12 = vsyncpa %s11, 0
    loop: start=0, step=1, limit=4
    $region2: #{tpu_custom_call.1} parent=1 // loop_pre_header
      _
    $region3: #{tpu_custom_call.1} parent=1 // loop_header
      %s14 = sphi 0, %s18
      %p15 = scmp.ge.s32.totalorder %s14, 4
      %s24 = sphi 0, %s26
      %s27 = sphi 0, %s24
      %s28 = sphi 0, %s27
      %s44 = sphi 0, %s28
      %s48 = sphi 0, %s48
      %s50 = sphi 0, %s48
      %s51 = sphi 0, %s50
      %s65 = sphi 0, %s51
      %s69 = sphi 0, %s69
      %s71 = sphi 0, %s69
      %s72 = sphi 0, %s71
      %s86 = sphi 0, %s72
      %s90 = sphi 0, %s90
      %s92 = sphi 0, %s90
      %s93 = sphi 0, %s92
      %s107 = sphi 0, %s93
      %s111 = sphi 0, %s111
      %s113 = sphi 0, %s111
      %s114 = sphi 0, %s113
      %s128 = sphi 0, %s114
      %s134 = sphi 0, %s136
      %s137 = sphi 0, %s134
      %s138 = sphi 0, %s137
      %s154 = sphi 0, %s138
    $region4: #{tpu_custom_call.1} parent=1 // loop_header_branch
      %17 = sbr.rel (%p15) target = $region8
    $region5: #{tpu_custom_call.1} parent=1 // loop_body
      %s19 = ssub.s32 %s14, 1
      %s20 = ssub.s32 %s14, 2
      %s21 = sadd.s32 %s14, 1
      %s22 = ssub.s32 %s14, %s21
      %p23 = scmp.eq.s32.totalorder %s22, 0
      %s25 = sadd.s32 %s24, 1
      %s26 = scalar_select %p23, %s24, %s25
      %p29 = pneg %p23
      %p30 = scmp.eq.s32.totalorder %s14, 1
      %p31 = por %p29, %p30
      %p32 = scmp.ne.s32.totalorder %s24, %s27
      %p33 = scmp.eq.s32.totalorder %s14, 0
      %p34 = por %p32, %p33
      %p35 = scmp.ne.s32.totalorder %s24, %s27
      %p36 = scmp.eq.s32.totalorder %s19, 1
      %p37 = por %p35, %p36
      %p38 = scmp.ne.s32.totalorder %s27, %s28
      %p39 = scmp.eq.s32.totalorder %s19, 0
      %p40 = por %p38, %p39
      %p41 = scmp.ne.s32.totalorder %s27, %s28
      %p42 = scmp.eq.s32.totalorder %s20, 1
      %p43 = por %p41, %p42
      %p45 = scmp.ne.s32.totalorder %s28, %s44
      %p46 = scmp.eq.s32.totalorder %s20, 0
      %p47 = por %p45, %p46
      %s49 = sadd.s32 %s48, 1
      %p52 = scmp.eq.s32.totalorder %s14, 1
      %p53 = scmp.ne.s32.totalorder %s48, %s50
      %p54 = scmp.eq.s32.totalorder %s14, 0
      %p55 = por %p53, %p54
      %p56 = scmp.ne.s32.totalorder %s48, %s50
      %p57 = scmp.eq.s32.totalorder %s19, 1
      %p58 = por %p56, %p57
      %p59 = scmp.ne.s32.totalorder %s50, %s51
      %p60 = scmp.eq.s32.totalorder %s19, 0
      %p61 = por %p59, %p60
      %p62 = scmp.ne.s32.totalorder %s50, %s51
      %p63 = scmp.eq.s32.totalorder %s20, 1
      %p64 = por %p62, %p63
      %p66 = scmp.ne.s32.totalorder %s51, %s65
      %p67 = scmp.eq.s32.totalorder %s20, 0
      %p68 = por %p66, %p67
      %s70 = sadd.s32 %s69, 1
      %p73 = scmp.eq.s32.totalorder %s14, 1
      %p74 = scmp.ne.s32.totalorder %s69, %s71
      %p75 = scmp.eq.s32.totalorder %s14, 0
      %p76 = por %p74, %p75
      %p77 = scmp.ne.s32.totalorder %s69, %s71
      %p78 = scmp.eq.s32.totalorder %s19, 1
      %p79 = por %p77, %p78
      %p80 = scmp.ne.s32.totalorder %s71, %s72
      %p81 = scmp.eq.s32.totalorder %s19, 0
      %p82 = por %p80, %p81
      %p83 = scmp.ne.s32.totalorder %s71, %s72
      %p84 = scmp.eq.s32.totalorder %s20, 1
      %p85 = por %p83, %p84
      %p87 = scmp.ne.s32.totalorder %s72, %s86
      %p88 = scmp.eq.s32.totalorder %s20, 0
      %p89 = por %p87, %p88
      %s91 = sadd.s32 %s90, 1
      %p94 = scmp.eq.s32.totalorder %s14, 1
      %p95 = scmp.ne.s32.totalorder %s90, %s92
      %p96 = scmp.eq.s32.totalorder %s14, 0
      %p97 = por %p95, %p96
      %p98 = scmp.ne.s32.totalorder %s90, %s92
      %p99 = scmp.eq.s32.totalorder %s19, 1
      %p100 = por %p98, %p99
      %p101 = scmp.ne.s32.totalorder %s92, %s93
      %p102 = scmp.eq.s32.totalorder %s19, 0
      %p103 = por %p101, %p102
      %p104 = scmp.ne.s32.totalorder %s92, %s93
      %p105 = scmp.eq.s32.totalorder %s20, 1
      %p106 = por %p104, %p105
      %p108 = scmp.ne.s32.totalorder %s93, %s107
      %p109 = scmp.eq.s32.totalorder %s20, 0
      %p110 = por %p108, %p109
      %s112 = sadd.s32 %s111, 1
      %p115 = scmp.eq.s32.totalorder %s14, 1
      %p116 = scmp.ne.s32.totalorder %s111, %s113
      %p117 = scmp.eq.s32.totalorder %s14, 0
      %p118 = por %p116, %p117
      %p119 = scmp.ne.s32.totalorder %s111, %s113
      %p120 = scmp.eq.s32.totalorder %s19, 1
      %p121 = por %p119, %p120
      %p122 = scmp.ne.s32.totalorder %s113, %s114
      %p123 = scmp.eq.s32.totalorder %s19, 0
      %p124 = por %p122, %p123
      %p125 = scmp.ne.s32.totalorder %s113, %s114
      %p126 = scmp.eq.s32.totalorder %s20, 1
      %p127 = por %p125, %p126
      %p129 = scmp.ne.s32.totalorder %s114, %s128
      %p130 = scmp.eq.s32.totalorder %s20, 0
      %p131 = por %p129, %p130
      %s132 = ssub.s32 %s14, %s21
      %p133 = scmp.eq.s32.totalorder %s132, 0
      %s135 = sadd.s32 %s134, 1
      %s136 = scalar_select %p133, %s134, %s135
      %p139 = pneg %p133
      %p140 = scmp.eq.s32.totalorder %s14, 1
      %p141 = por %p139, %p140
      %p142 = scmp.ne.s32.totalorder %s134, %s137
      %p143 = scmp.eq.s32.totalorder %s14, 0
      %p144 = por %p142, %p143
      %p145 = scmp.ne.s32.totalorder %s134, %s137
      %p146 = scmp.eq.s32.totalorder %s19, 1
      %p147 = por %p145, %p146
      %p148 = scmp.ne.s32.totalorder %s137, %s138
      %p149 = scmp.eq.s32.totalorder %s19, 0
      %p150 = por %p148, %p149
      %p151 = scmp.ne.s32.totalorder %s137, %s138
      %p152 = scmp.eq.s32.totalorder %s20, 1
      %p153 = por %p151, %p152
      %p155 = scmp.ne.s32.totalorder %s138, %s154
      %p156 = scmp.eq.s32.totalorder %s20, 0
      %p157 = por %p155, %p156
      %p158 = scmp.le.s32.totalorder 1, %s14
      %p159 = scmp.lt.s32.totalorder %s14, 3
      %p160 = pnand %p158, %p159
      %p161 = pneg %p160
      // Predicated region
      $region9: #{tpu_custom_call.1} parent=5 // pred_check
        _
      $region10: #{tpu_custom_call.1} parent=5 // pred_check_branch
        %163 = sbr.rel (%p160) target = $region12
      $region11: #{tpu_custom_call.1} parent=5 // pred_region
        %s164 = ssub.s32 %s14, 1
        // Predicated region
        $region13: #{tpu_custom_call.1} parent=11 // pred_check
          %p165 = pneg %p61
        $region14: #{tpu_custom_call.1} parent=11 // pred_check_branch
          %167 = sbr.rel (%p165) target = $region16
        $region15: #{tpu_custom_call.1} parent=11 // pred_region
          _
        $region16: #{tpu_custom_call.1} parent=11 // pred_fallthru
          _
        // Predicated region
        $region17: #{tpu_custom_call.1} parent=11 // pred_check
          %p168 = pneg %p82
        $region18: #{tpu_custom_call.1} parent=11 // pred_check_branch
          %170 = sbr.rel (%p168) target = $region20
        $region19: #{tpu_custom_call.1} parent=11 // pred_region
          _
        $region20: #{tpu_custom_call.1} parent=11 // pred_fallthru
          _
        // Predicated region
        $region21: #{tpu_custom_call.1} parent=11 // pred_check
          %p171 = pneg %p103
        $region22: #{tpu_custom_call.1} parent=11 // pred_check_branch
          %173 = sbr.rel (%p171) target = $region24
        $region23: #{tpu_custom_call.1} parent=11 // pred_region
          _
        $region24: #{tpu_custom_call.1} parent=11 // pred_fallthru
          _
        // Predicated region
        $region25: #{tpu_custom_call.1} parent=11 // pred_check
          %p174 = pneg %p124
        $region26: #{tpu_custom_call.1} parent=11 // pred_check_branch
          %176 = sbr.rel (%p174) target = $region28
        $region27: #{tpu_custom_call.1} parent=11 // pred_region
          _
        $region28: #{tpu_custom_call.1} parent=11 // pred_fallthru
          _
      $region12: #{tpu_custom_call.1} parent=5 // pred_fallthru
        _
      %p177 = scmp.lt.s32.totalorder %s14, 2
      // Predicated region
      $region29: #{tpu_custom_call.1} parent=5 // pred_check
        %p178 = pneg %p177
      $region30: #{tpu_custom_call.1} parent=5 // pred_check_branch
        %180 = sbr.rel (%p178) target = $region32
      $region31: #{tpu_custom_call.1} parent=5 // pred_region
        // Predicated region
        $region33: #{tpu_custom_call.1} parent=31 // pred_check
          %p181 = pneg %p34
        $region34: #{tpu_custom_call.1} parent=31 // pred_check_branch
          %183 = sbr.rel (%p181) target = $region36
        $region35: #{tpu_custom_call.1} parent=31 // pred_region
          %p184 = scmp.lt.s32.totalorder %s14, 1
          %s185 = scalar_select %p184, %s14, 1
          %s186 = smul.addr %s185, 2
          %s187 = smul.addr %s186, 8
          %s188 = scalar_lea.vmem %s0, %s187
        $region36: #{tpu_custom_call.1} parent=31 // pred_fallthru
          _
      $region32: #{tpu_custom_call.1} parent=5 // pred_fallthru
        _
      %p189 = scmp.le.s32.totalorder 1, %s14
      %p190 = scmp.lt.s32.totalorder %s14, 3
      %p191 = pnand %p189, %p190
      %p192 = pneg %p191
      // Predicated region
      $region37: #{tpu_custom_call.1} parent=5 // pred_check
        _
      $region38: #{tpu_custom_call.1} parent=5 // pred_check_branch
        %194 = sbr.rel (%p191) target = $region40
      $region39: #{tpu_custom_call.1} parent=5 // pred_region
        %s195 = ssub.s32 %s14, 1
        %p196 = scmp.lt.s32.totalorder %s19, 1
        %s197 = scalar_select %p196, %s19, 1
        %s198 = smul.addr %s197, 2
        %s199 = smul.addr %s198, 8
        %s200 = scalar_lea.vmem %s0, %s199
        %p201 = pneg %p40
        %p202 = pneg %p37
        %p203 = pneg %p61
        %p204 = pneg %p58
        %p205 = pneg %p82
        %p206 = pneg %p79
        %p207 = pneg %p103
        %p208 = pneg %p100
        %p209 = pneg %p124
        %p210 = pneg %p121
        %p211 = pneg %p150
        %p212 = pneg %p147
        %s213 = sand.u32 %s137, 1
        %s214 = scalar_lea.sflag [#allocation3], %s213
        %s215 = sand.u32 %s137, 1
        %s216 = smul.addr %s215, 16
        %s217 = scalar_lea.vmem [#allocation2], %s216
        %p218 = scmp.lt.s32.totalorder %s19, 1
        %s219 = scalar_select %p218, %s19, 1
        %s220 = smul.addr %s219, 2
        %s221 = smul.addr %s220, 8
        %s222 = scalar_lea.vmem %s0, %s221
        %v224 = vld [vmem:[%s222] sm:$0xff]
        %v225 = vld [vmem:[%s222 + $0x8] sm:$0xff]
        %v226 = vld [vmem:[%s1] sm:$0xff]
        %v227 = vld [vmem:[%s1 + $0x8] sm:$0xff]
        %v228 = vld [vmem:[%s1 + $0x10] sm:$0x1]
        %v229 = vld [vmem:[%s1 + $0x18] sm:$0x1]
        %v230 = vld [vmem:[%s4] sm:$0xff]
        %v231 = vld [vmem:[%s4 + $0x8] sm:$0xf]
        %v232 = vld [vmem:[%s4 + $0x10] sm:$0xff]
        %v233 = vld [vmem:[%s4 + $0x18] sm:$0xf]
        %v234 = vld [vmem:[%s4 + $0x20] sm:$0xff]
        %v235 = vld [vmem:[%s4 + $0x28] sm:$0xf]
        %v236 = vld [vmem:[%s2] sm:$0x3]
        %v237 = vpack.c.bf16 %v224, %v224
        %v238 = vpack.c.bf16 %v225, %v225
        %240 = vset.pattern.permute.xlu0 0
        %241 = vperm.xlu0 %240, %v230
        %v242 = vpop.permute.xlu0 %241
        %vm244 = vcmask 64512
        %v246 = vsel %vm244, %v236, 0
        %vm248 = vcmask 1043456
        %v250 = vsel %vm248, %v237, 0
        %v253 = vsel %vm248, %v238, 0
        %255 = vmatprep.subr.bf16.mxu0 %v253
        %256 = vmatpush1.bf16.msra.mxu0 %v250
        %257 = vmatprep.subr.bf16.mxu0 0
        %258 = vmatpush1.bf16.msra.mxu0 0
        %259 = vmatprep.subr.bf16.mxu0 0
        %260 = vmatpush1.bf16.msra.mxu0 0
        %261 = vmatprep.subr.bf16.mxu0 0
        %262 = vmatpush1.bf16.msra.mxu0 0
        %263 = vmatprep.subr.bf16.mxu0 0
        %264 = vmatpush1.bf16.msra.mxu0 0
        %265 = vmatprep.subr.bf16.mxu0 0
        %266 = vmatpush1.bf16.msra.mxu0 0
        %267 = vmatprep.subr.bf16.mxu0 0
        %268 = vmatpush1.bf16.msra.mxu0 0
        %269 = vmatprep.subr.bf16.mxu0 0
        %270 = vmatpush1.bf16.msra.mxu0 0
        %271 = vmatprep.subr.bf16.mxu0 0
        %272 = vmatpush1.bf16.msra.mxu0 0
        %273 = vmatprep.subr.bf16.mxu0 0
        %274 = vmatpush1.bf16.msra.mxu0 0
        %275 = vmatprep.subr.bf16.mxu0 0
        %276 = vmatpush1.bf16.msra.mxu0 0
        %277 = vmatprep.subr.bf16.mxu0 0
        %278 = vmatpush1.bf16.msra.mxu0 0
        %279 = vmatprep.subr.bf16.mxu0 0
        %280 = vmatpush1.bf16.msra.mxu0 0
        %281 = vmatprep.subr.bf16.mxu0 0
        %282 = vmatpush1.bf16.msra.mxu0 0
        %283 = vmatprep.subr.bf16.mxu0 0
        %284 = vmatpush1.bf16.msra.mxu0 0
        %285 = vmatprep.subr.bf16.mxu0 0
        %286 = vmatpush1.bf16.msra.mxu0 0
        %287 = vmatprep.mubr.bf16.mxu0 0
        %288 = vmatmul.mubr.bf16.gmra.mrb[0].mxu0 %v246
        %v289 = vpop.f32.mrb[0].mxu0
        %v290 = vadd.f32 %v242, %v289
        %v291 = vpop.f32.mrb[0].mxu0
        %v292 = vadd.f32 %v242, %v291
        %v293 = vpop.f32.mrb[0].mxu0
        %v294 = vpop.f32.mrb[0].mxu0
        %295 = vdwg.mxu0
        %v296 = vmul.f32 %v290, 0.1
        %v297 = vmul.f32 %v292, 0.1
        %v298 = vmax.f32 %v290, %v296
        %v299 = vmax.f32 %v292, %v297
        %300 = vrot.lane.b32.xlu0 %v298, 17
        %v301 = vpop.permute.xlu0 %300
        %302 = vrot.lane.b32.xlu0 %v299, 17
        %v303 = vpop.permute.xlu0 %302
        %v304 = vlaneseq
        %v305 = vand.u32 %v304, 127
        %vm306 = vcmp.lt.s32.totalorder %v305, 17
        %v307 = vsel %vm306, %v301, %v303
        %v308 = vsel %vm306, %v303, %v301
        %v309 = vlaneseq
        %v310 = vshrl.u32 %v309, 7
        %v311 = vsub.s32 0, %v310
        %v312 = vrot.slane %v226, %v311
        %v313 = vlaneseq
        %v314 = vshrl.u32 %v313, 7
        %v315 = vsub.s32 0, %v314
        %v316 = vrot.slane %v227, %v315
        %v317 = vmul.f32 %v312, %v308
        %v318 = vmul.f32 %v316, %v307
        %v319 = vpack.c.bf16 %v317, %v317
        %v320 = vpack.c.bf16 %v318, %v318
        %v321 = vld [vmem:[%s3] sm:$0xf]
        %322 = vrot.lane.b32.xlu0 %v298, 16
        %v323 = vpop.permute.xlu0 %322
        %324 = vrot.lane.b32.xlu0 %v299, 16
        %v325 = vpop.permute.xlu0 %324
        %vm326 = vcmp.lt.s32.totalorder %v305, 16
        %v327 = vsel %vm326, %v323, %v325
        %v328 = vsel %vm326, %v325, %v323
        %v329 = vlaneseq
        %v330 = vshrl.u32 %v329, 7
        %v331 = vsub.s32 1, %v330
        %v332 = vrot.slane %v226, %v331
        %v333 = vlaneseq
        %v334 = vshrl.u32 %v333, 7
        %v335 = vsub.s32 1, %v334
        %v336 = vrot.slane %v227, %v335
        %v337 = vmul.f32 %v332, %v328
        %v338 = vmul.f32 %v336, %v327
        %v339 = vpack.c.bf16 %v337, %v337
        %v340 = vpack.c.bf16 %v338, %v338
        %s341 = scalar_lea.vmem %s3, 4
        %v342 = vld [vmem:[%s341] sm:$0xf]
        %vm343 = vcmask 31744
        %v345 = vsel %vm343, %v342, 0
        %vm347 = vcmask 1041408
        %v349 = vsel %vm347, %v339, 0
        %v352 = vsel %vm347, %v340, 0
        %354 = vmatprep.subr.bf16.mxu0 %v352
        %355 = vmatpush1.bf16.msra.mxu0 %v349
        %356 = vmatprep.subr.bf16.mxu0 0
        %357 = vmatpush1.bf16.msra.mxu0 0
        %358 = vmatprep.subr.bf16.mxu0 0
        %359 = vmatpush1.bf16.msra.mxu0 0
        %360 = vmatprep.subr.bf16.mxu0 0
        %361 = vmatpush1.bf16.msra.mxu0 0
        %362 = vmatprep.subr.bf16.mxu0 0
        %363 = vmatpush1.bf16.msra.mxu0 0
        %364 = vmatprep.subr.bf16.mxu0 0
        %365 = vmatpush1.bf16.msra.mxu0 0
        %366 = vmatprep.subr.bf16.mxu0 0
        %367 = vmatpush1.bf16.msra.mxu0 0
        %368 = vmatprep.subr.bf16.mxu0 0
        %369 = vmatpush1.bf16.msra.mxu0 0
        %370 = vmatprep.subr.bf16.mxu0 0
        %371 = vmatpush1.bf16.msra.mxu0 0
        %372 = vmatprep.subr.bf16.mxu0 0
        %373 = vmatpush1.bf16.msra.mxu0 0
        %374 = vmatprep.subr.bf16.mxu0 0
        %375 = vmatpush1.bf16.msra.mxu0 0
        %376 = vmatprep.subr.bf16.mxu0 0
        %377 = vmatpush1.bf16.msra.mxu0 0
        %378 = vmatprep.subr.bf16.mxu0 0
        %379 = vmatpush1.bf16.msra.mxu0 0
        %380 = vmatprep.subr.bf16.mxu0 0
        %381 = vmatpush1.bf16.msra.mxu0 0
        %382 = vmatprep.subr.bf16.mxu0 0
        %383 = vmatpush1.bf16.msra.mxu0 0
        %384 = vmatprep.subr.bf16.mxu0 0
        %385 = vmatpush1.bf16.msra.mxu0 0
        %386 = vmatprep.mubr.bf16.mxu0 0
        %387 = vmatmul.mubr.bf16.gmra.mrb[0].mxu0 %v345
        %v388 = vpop.f32.mrb[0].mxu0
        %v389 = vadd.f32 0.0, %v388
        %v390 = vpop.f32.mrb[0].mxu0
        %v391 = vadd.f32 0.0, %v390
        %v392 = vpop.f32.mrb[0].mxu0
        %v393 = vpop.f32.mrb[0].mxu0
        %394 = vdwg.mxu0
        %v396 = vsel %vm343, %v321, 0
        %v399 = vsel %vm347, %v319, 0
        %v402 = vsel %vm347, %v320, 0
        %404 = vmatprep.subr.bf16.mxu0 %v402
        %405 = vmatpush1.bf16.msra.mxu0 %v399
        %406 = vmatprep.subr.bf16.mxu0 0
        %407 = vmatpush1.bf16.msra.mxu0 0
        %408 = vmatprep.subr.bf16.mxu0 0
        %409 = vmatpush1.bf16.msra.mxu0 0
        %410 = vmatprep.subr.bf16.mxu0 0
        %411 = vmatpush1.bf16.msra.mxu0 0
        %412 = vmatprep.subr.bf16.mxu0 0
        %413 = vmatpush1.bf16.msra.mxu0 0
        %414 = vmatprep.subr.bf16.mxu0 0
        %415 = vmatpush1.bf16.msra.mxu0 0
        %416 = vmatprep.subr.bf16.mxu0 0
        %417 = vmatpush1.bf16.msra.mxu0 0
        %418 = vmatprep.subr.bf16.mxu0 0
        %419 = vmatpush1.bf16.msra.mxu0 0
        %420 = vmatprep.subr.bf16.mxu0 0
        %421 = vmatpush1.bf16.msra.mxu0 0
        %422 = vmatprep.subr.bf16.mxu0 0
        %423 = vmatpush1.bf16.msra.mxu0 0
        %424 = vmatprep.subr.bf16.mxu0 0
        %425 = vmatpush1.bf16.msra.mxu0 0
        %426 = vmatprep.subr.bf16.mxu0 0
        %427 = vmatpush1.bf16.msra.mxu0 0
        %428 = vmatprep.subr.bf16.mxu0 0
        %429 = vmatpush1.bf16.msra.mxu0 0
        %430 = vmatprep.subr.bf16.mxu0 0
        %431 = vmatpush1.bf16.msra.mxu0 0
        %432 = vmatprep.subr.bf16.mxu0 0
        %433 = vmatpush1.bf16.msra.mxu0 0
        %434 = vmatprep.subr.bf16.mxu0 0
        %435 = vmatpush1.bf16.msra.mxu0 0
        %436 = vmatprep.mubr.bf16.mxu0 0
        %437 = vmatmul.mubr.bf16.gmra.mrb[0].mxu0 %v396
        %v438 = vpop.f32.mrb[0].mxu0
        %v439 = vadd.f32 %v389, %v438
        %v440 = vpop.f32.mrb[0].mxu0
        %v441 = vadd.f32 %v391, %v440
        %v442 = vpop.f32.mrb[0].mxu0
        %v443 = vpop.f32.mrb[0].mxu0
        %444 = vdwg.mxu0
        %445 = vrot.lane.b32.xlu0 %v298, 15
        %v446 = vpop.permute.xlu0 %445
        %447 = vrot.lane.b32.xlu0 %v299, 15
        %v448 = vpop.permute.xlu0 %447
        %vm449 = vcmp.lt.s32.totalorder %v305, 15
        %v450 = vsel %vm449, %v446, %v448
        %v451 = vsel %vm449, %v448, %v446
        %v452 = vlaneseq
        %v453 = vshrl.u32 %v452, 7
        %v454 = vsub.s32 2, %v453
        %v455 = vrot.slane %v226, %v454
        %v456 = vlaneseq
        %v457 = vshrl.u32 %v456, 7
        %v458 = vsub.s32 2, %v457
        %v459 = vrot.slane %v227, %v458
        %v460 = vmul.f32 %v455, %v451
        %v461 = vmul.f32 %v459, %v450
        %v462 = vpack.c.bf16 %v460, %v460
        %v463 = vpack.c.bf16 %v461, %v461
        %s464 = scalar_lea.vmem %s3, 8
        %v465 = vld [vmem:[%s464] sm:$0xf]
        %v467 = vsel %vm343, %v465, 0
        %v470 = vsel %vm347, %v462, 0
        %v473 = vsel %vm347, %v463, 0
        %475 = vmatprep.subr.bf16.mxu0 %v473
        %476 = vmatpush1.bf16.msra.mxu0 %v470
        %477 = vmatprep.subr.bf16.mxu0 0
        %478 = vmatpush1.bf16.msra.mxu0 0
        %479 = vmatprep.subr.bf16.mxu0 0
        %480 = vmatpush1.bf16.msra.mxu0 0
        %481 = vmatprep.subr.bf16.mxu0 0
        %482 = vmatpush1.bf16.msra.mxu0 0
        %483 = vmatprep.subr.bf16.mxu0 0
        %484 = vmatpush1.bf16.msra.mxu0 0
        %485 = vmatprep.subr.bf16.mxu0 0
        %486 = vmatpush1.bf16.msra.mxu0 0
        %487 = vmatprep.subr.bf16.mxu0 0
        %488 = vmatpush1.bf16.msra.mxu0 0
        %489 = vmatprep.subr.bf16.mxu0 0
        %490 = vmatpush1.bf16.msra.mxu0 0
        %491 = vmatprep.subr.bf16.mxu0 0
        %492 = vmatpush1.bf16.msra.mxu0 0
        %493 = vmatprep.subr.bf16.mxu0 0
        %494 = vmatpush1.bf16.msra.mxu0 0
        %495 = vmatprep.subr.bf16.mxu0 0
        %496 = vmatpush1.bf16.msra.mxu0 0
        %497 = vmatprep.subr.bf16.mxu0 0
        %498 = vmatpush1.bf16.msra.mxu0 0
        %499 = vmatprep.subr.bf16.mxu0 0
        %500 = vmatpush1.bf16.msra.mxu0 0
        %501 = vmatprep.subr.bf16.mxu0 0
        %502 = vmatpush1.bf16.msra.mxu0 0
        %503 = vmatprep.subr.bf16.mxu0 0
        %504 = vmatpush1.bf16.msra.mxu0 0
        %505 = vmatprep.subr.bf16.mxu0 0
        %506 = vmatpush1.bf16.msra.mxu0 0
        %507 = vmatprep.mubr.bf16.mxu0 0
        %508 = vmatmul.mubr.bf16.gmra.mrb[0].mxu0 %v467
        %v509 = vpop.f32.mrb[0].mxu0
        %v510 = vadd.f32 0.0, %v509
        %v511 = vpop.f32.mrb[0].mxu0
        %v512 = vadd.f32 0.0, %v511
        %v513 = vpop.f32.mrb[0].mxu0
        %v514 = vpop.f32.mrb[0].mxu0
        %515 = vdwg.mxu0
        %v516 = vadd.f32 %v439, %v510
        %v517 = vadd.f32 %v441, %v512
        %518 = vrot.lane.b32.xlu0 %v298, 1
        %v519 = vpop.permute.xlu0 %518
        %520 = vrot.lane.b32.xlu0 %v299, 1
        %v521 = vpop.permute.xlu0 %520
        %vm522 = vcmp.lt.s32.totalorder %v305, 1
        %v523 = vsel %vm522, %v519, %v521
        %v524 = vsel %vm522, %v521, %v519
        %v525 = vlaneseq
        %v526 = vshrl.u32 %v525, 7
        %v527 = vsub.s32 3, %v526
        %v528 = vrot.slane %v226, %v527
        %v529 = vlaneseq
        %v530 = vshrl.u32 %v529, 7
        %v531 = vsub.s32 3, %v530
        %v532 = vrot.slane %v227, %v531
        %v533 = vmul.f32 %v528, %v524
        %v534 = vmul.f32 %v532, %v523
        %v535 = vpack.c.bf16 %v533, %v533
        %v536 = vpack.c.bf16 %v534, %v534
        %s537 = scalar_lea.vmem %s3, 12
        %v538 = vld [vmem:[%s537] sm:$0xf]
        %v540 = vsel %vm343, %v538, 0
        %v543 = vsel %vm347, %v535, 0
        %v546 = vsel %vm347, %v536, 0
        %548 = vmatprep.subr.bf16.mxu0 %v546
        %549 = vmatpush1.bf16.msra.mxu0 %v543
        %550 = vmatprep.subr.bf16.mxu0 0
        %551 = vmatpush1.bf16.msra.mxu0 0
        %552 = vmatprep.subr.bf16.mxu0 0
        %553 = vmatpush1.bf16.msra.mxu0 0
        %554 = vmatprep.subr.bf16.mxu0 0
        %555 = vmatpush1.bf16.msra.mxu0 0
        %556 = vmatprep.subr.bf16.mxu0 0
        %557 = vmatpush1.bf16.msra.mxu0 0
        %558 = vmatprep.subr.bf16.mxu0 0
        %559 = vmatpush1.bf16.msra.mxu0 0
        %560 = vmatprep.subr.bf16.mxu0 0
        %561 = vmatpush1.bf16.msra.mxu0 0
        %562 = vmatprep.subr.bf16.mxu0 0
        %563 = vmatpush1.bf16.msra.mxu0 0
        %564 = vmatprep.subr.bf16.mxu0 0
        %565 = vmatpush1.bf16.msra.mxu0 0
        %566 = vmatprep.subr.bf16.mxu0 0
        %567 = vmatpush1.bf16.msra.mxu0 0
        %568 = vmatprep.subr.bf16.mxu0 0
        %569 = vmatpush1.bf16.msra.mxu0 0
        %570 = vmatprep.subr.bf16.mxu0 0
        %571 = vmatpush1.bf16.msra.mxu0 0
        %572 = vmatprep.subr.bf16.mxu0 0
        %573 = vmatpush1.bf16.msra.mxu0 0
        %574 = vmatprep.subr.bf16.mxu0 0
        %575 = vmatpush1.bf16.msra.mxu0 0
        %576 = vmatprep.subr.bf16.mxu0 0
        %577 = vmatpush1.bf16.msra.mxu0 0
        %578 = vmatprep.subr.bf16.mxu0 0
        %579 = vmatpush1.bf16.msra.mxu0 0
        %580 = vmatprep.mubr.bf16.mxu0 0
        %581 = vmatmul.mubr.bf16.gmra.mrb[0].mxu0 %v540
        %v582 = vpop.f32.mrb[0].mxu0
        %v583 = vadd.f32 0.0, %v582
        %v584 = vpop.f32.mrb[0].mxu0
        %v585 = vadd.f32 0.0, %v584
        %v586 = vpop.f32.mrb[0].mxu0
        %v587 = vpop.f32.mrb[0].mxu0
        %588 = vdwg.mxu0
        %v589 = vadd.f32 %v516, %v583
        %v590 = vadd.f32 %v517, %v585
        %v591 = vlaneseq
        %v592 = vshrl.u32 %v591, 7
        %v593 = vsub.s32 4, %v592
        %v594 = vrot.slane %v226, %v593
        %v595 = vlaneseq
        %v596 = vshrl.u32 %v595, 7
        %v597 = vsub.s32 4, %v596
        %v598 = vrot.slane %v227, %v597
        %v599 = vmul.f32 %v594, %v298
        %v600 = vmul.f32 %v598, %v299
        %v601 = vpack.c.bf16 %v599, %v599
        %v602 = vpack.c.bf16 %v600, %v600
        %s603 = scalar_lea.vmem %s3, 16
        %v604 = vld [vmem:[%s603] sm:$0xf]
        %v606 = vsel %vm343, %v604, 0
        %v609 = vsel %vm347, %v601, 0
        %v612 = vsel %vm347, %v602, 0
        %614 = vmatprep.subr.bf16.mxu0 %v612
        %615 = vmatpush1.bf16.msra.mxu0 %v609
        %616 = vmatprep.subr.bf16.mxu0 0
        %617 = vmatpush1.bf16.msra.mxu0 0
        %618 = vmatprep.subr.bf16.mxu0 0
        %619 = vmatpush1.bf16.msra.mxu0 0
        %620 = vmatprep.subr.bf16.mxu0 0
        %621 = vmatpush1.bf16.msra.mxu0 0
        %622 = vmatprep.subr.bf16.mxu0 0
        %623 = vmatpush1.bf16.msra.mxu0 0
        %624 = vmatprep.subr.bf16.mxu0 0
        %625 = vmatpush1.bf16.msra.mxu0 0
        %626 = vmatprep.subr.bf16.mxu0 0
        %627 = vmatpush1.bf16.msra.mxu0 0
        %628 = vmatprep.subr.bf16.mxu0 0
        %629 = vmatpush1.bf16.msra.mxu0 0
        %630 = vmatprep.subr.bf16.mxu0 0
        %631 = vmatpush1.bf16.msra.mxu0 0
        %632 = vmatprep.subr.bf16.mxu0 0
        %633 = vmatpush1.bf16.msra.mxu0 0
        %634 = vmatprep.subr.bf16.mxu0 0
        %635 = vmatpush1.bf16.msra.mxu0 0
        %636 = vmatprep.subr.bf16.mxu0 0
        %637 = vmatpush1.bf16.msra.mxu0 0
        %638 = vmatprep.subr.bf16.mxu0 0
        %639 = vmatpush1.bf16.msra.mxu0 0
        %640 = vmatprep.subr.bf16.mxu0 0
        %641 = vmatpush1.bf16.msra.mxu0 0
        %642 = vmatprep.subr.bf16.mxu0 0
        %643 = vmatpush1.bf16.msra.mxu0 0
        %644 = vmatprep.subr.bf16.mxu0 0
        %645 = vmatpush1.bf16.msra.mxu0 0
        %646 = vmatprep.mubr.bf16.mxu0 0
        %647 = vmatmul.mubr.bf16.gmra.mrb[0].mxu0 %v606
        %v648 = vpop.f32.mrb[0].mxu0
        %v649 = vadd.f32 0.0, %v648
        %v650 = vpop.f32.mrb[0].mxu0
        %v651 = vadd.f32 0.0, %v650
        %v652 = vpop.f32.mrb[0].mxu0
        %v653 = vpop.f32.mrb[0].mxu0
        %654 = vdwg.mxu0
        %v655 = vadd.f32 %v589, %v649
        %v656 = vadd.f32 %v590, %v651
        %657 = vrot.lane.b32.xlu0 %v298, 127
        %v658 = vpop.permute.xlu0 %657
        %659 = vrot.lane.b32.xlu0 %v299, 127
        %v660 = vpop.permute.xlu0 %659
        %vm661 = vcmp.lt.s32.totalorder %v305, 127
        %v662 = vsel %vm661, %v658, %v660
        %v663 = vsel %vm661, %v660, %v658
        %v664 = vlaneseq
        %v665 = vshrl.u32 %v664, 7
        %v666 = vsub.s32 5, %v665
        %v667 = vrot.slane %v226, %v666
        %v668 = vlaneseq
        %v669 = vshrl.u32 %v668, 7
        %v670 = vsub.s32 5, %v669
        %v671 = vrot.slane %v227, %v670
        %v672 = vmul.f32 %v667, %v662
        %v673 = vmul.f32 %v671, %v663
        %v674 = vpack.c.bf16 %v672, %v672
        %v675 = vpack.c.bf16 %v673, %v673
        %s676 = scalar_lea.vmem %s3, 20
        %v677 = vld [vmem:[%s676] sm:$0xf]
        %v679 = vsel %vm343, %v677, 0
        %v682 = vsel %vm347, %v674, 0
        %v685 = vsel %vm347, %v675, 0
        %687 = vmatprep.subr.bf16.mxu0 %v685
        %688 = vmatpush1.bf16.msra.mxu0 %v682
        %689 = vmatprep.subr.bf16.mxu0 0
        %690 = vmatpush1.bf16.msra.mxu0 0
        %691 = vmatprep.subr.bf16.mxu0 0
        %692 = vmatpush1.bf16.msra.mxu0 0
        %693 = vmatprep.subr.bf16.mxu0 0
        %694 = vmatpush1.bf16.msra.mxu0 0
        %695 = vmatprep.subr.bf16.mxu0 0
        %696 = vmatpush1.bf16.msra.mxu0 0
        %697 = vmatprep.subr.bf16.mxu0 0
        %698 = vmatpush1.bf16.msra.mxu0 0
        %699 = vmatprep.subr.bf16.mxu0 0
        %700 = vmatpush1.bf16.msra.mxu0 0
        %701 = vmatprep.subr.bf16.mxu0 0
        %702 = vmatpush1.bf16.msra.mxu0 0
        %703 = vmatprep.subr.bf16.mxu0 0
        %704 = vmatpush1.bf16.msra.mxu0 0
        %705 = vmatprep.subr.bf16.mxu0 0
        %706 = vmatpush1.bf16.msra.mxu0 0
        %707 = vmatprep.subr.bf16.mxu0 0
        %708 = vmatpush1.bf16.msra.mxu0 0
        %709 = vmatprep.subr.bf16.mxu0 0
        %710 = vmatpush1.bf16.msra.mxu0 0
        %711 = vmatprep.subr.bf16.mxu0 0
        %712 = vmatpush1.bf16.msra.mxu0 0
        %713 = vmatprep.subr.bf16.mxu0 0
        %714 = vmatpush1.bf16.msra.mxu0 0
        %715 = vmatprep.subr.bf16.mxu0 0
        %716 = vmatpush1.bf16.msra.mxu0 0
        %717 = vmatprep.subr.bf16.mxu0 0
        %718 = vmatpush1.bf16.msra.mxu0 0
        %719 = vmatprep.mubr.bf16.mxu0 0
        %720 = vmatmul.mubr.bf16.gmra.mrb[0].mxu0 %v679
        %v721 = vpop.f32.mrb[0].mxu0
        %v722 = vadd.f32 0.0, %v721
        %v723 = vpop.f32.mrb[0].mxu0
        %v724 = vadd.f32 0.0, %v723
        %v725 = vpop.f32.mrb[0].mxu0
        %v726 = vpop.f32.mrb[0].mxu0
        %727 = vdwg.mxu0
        %v728 = vadd.f32 %v655, %v722
        %v729 = vadd.f32 %v656, %v724
        %730 = vrot.lane.b32.xlu0 %v298, 113
        %v731 = vpop.permute.xlu0 %730
        %732 = vrot.lane.b32.xlu0 %v299, 113
        %v733 = vpop.permute.xlu0 %732
        %vm734 = vcmp.lt.s32.totalorder %v305, 113
        %v735 = vsel %vm734, %v731, %v733
        %v736 = vsel %vm734, %v733, %v731
        %v737 = vlaneseq
        %v738 = vshrl.u32 %v737, 7
        %v739 = vsub.s32 6, %v738
        %v740 = vrot.slane %v226, %v739
        %v741 = vlaneseq
        %v742 = vshrl.u32 %v741, 7
        %v743 = vsub.s32 6, %v742
        %v744 = vrot.slane %v227, %v743
        %v745 = vmul.f32 %v740, %v735
        %v746 = vmul.f32 %v744, %v736
        %v747 = vpack.c.bf16 %v745, %v745
        %v748 = vpack.c.bf16 %v746, %v746
        %s749 = scalar_lea.vmem %s3, 24
        %v750 = vld [vmem:[%s749] sm:$0xf]
        %v752 = vsel %vm343, %v750, 0
        %v755 = vsel %vm347, %v747, 0
        %v758 = vsel %vm347, %v748, 0
        %760 = vmatprep.subr.bf16.mxu0 %v758
        %761 = vmatpush1.bf16.msra.mxu0 %v755
        %762 = vmatprep.subr.bf16.mxu0 0
        %763 = vmatpush1.bf16.msra.mxu0 0
        %764 = vmatprep.subr.bf16.mxu0 0
        %765 = vmatpush1.bf16.msra.mxu0 0
        %766 = vmatprep.subr.bf16.mxu0 0
        %767 = vmatpush1.bf16.msra.mxu0 0
        %768 = vmatprep.subr.bf16.mxu0 0
        %769 = vmatpush1.bf16.msra.mxu0 0
        %770 = vmatprep.subr.bf16.mxu0 0
        %771 = vmatpush1.bf16.msra.mxu0 0
        %772 = vmatprep.subr.bf16.mxu0 0
        %773 = vmatpush1.bf16.msra.mxu0 0
        %774 = vmatprep.subr.bf16.mxu0 0
        %775 = vmatpush1.bf16.msra.mxu0 0
        %776 = vmatprep.subr.bf16.mxu0 0
        %777 = vmatpush1.bf16.msra.mxu0 0
        %778 = vmatprep.subr.bf16.mxu0 0
        %779 = vmatpush1.bf16.msra.mxu0 0
        %780 = vmatprep.subr.bf16.mxu0 0
        %781 = vmatpush1.bf16.msra.mxu0 0
        %782 = vmatprep.subr.bf16.mxu0 0
        %783 = vmatpush1.bf16.msra.mxu0 0
        %784 = vmatprep.subr.bf16.mxu0 0
        %785 = vmatpush1.bf16.msra.mxu0 0
        %786 = vmatprep.subr.bf16.mxu0 0
        %787 = vmatpush1.bf16.msra.mxu0 0
        %788 = vmatprep.subr.bf16.mxu0 0
        %789 = vmatpush1.bf16.msra.mxu0 0
        %790 = vmatprep.subr.bf16.mxu0 0
        %791 = vmatpush1.bf16.msra.mxu0 0
        %792 = vmatprep.mubr.bf16.mxu0 0
        %793 = vmatmul.mubr.bf16.gmra.mrb[0].mxu0 %v752
        %v794 = vpop.f32.mrb[0].mxu0
        %v795 = vadd.f32 0.0, %v794
        %v796 = vpop.f32.mrb[0].mxu0
        %v797 = vadd.f32 0.0, %v796
        %v798 = vpop.f32.mrb[0].mxu0
        %v799 = vpop.f32.mrb[0].mxu0
        %800 = vdwg.mxu0
        %v801 = vadd.f32 %v728, %v795
        %v802 = vadd.f32 %v729, %v797
        %803 = vrot.lane.b32.xlu0 %v298, 112
        %v804 = vpop.permute.xlu0 %803
        %805 = vrot.lane.b32.xlu0 %v299, 112
        %v806 = vpop.permute.xlu0 %805
        %vm807 = vcmp.lt.s32.totalorder %v305, 112
        %v808 = vsel %vm807, %v804, %v806
        %v809 = vsel %vm807, %v806, %v804
        %v810 = vlaneseq
        %v811 = vshrl.u32 %v810, 7
        %v812 = vsub.s32 7, %v811
        %v813 = vrot.slane %v226, %v812
        %v814 = vlaneseq
        %v815 = vshrl.u32 %v814, 7
        %v816 = vsub.s32 7, %v815
        %v817 = vrot.slane %v227, %v816
        %v818 = vmul.f32 %v813, %v808
        %v819 = vmul.f32 %v817, %v809
        %v820 = vpack.c.bf16 %v818, %v818
        %v821 = vpack.c.bf16 %v819, %v819
        %s822 = scalar_lea.vmem %s3, 28
        %v823 = vld [vmem:[%s822] sm:$0xf]
        %v825 = vsel %vm343, %v823, 0
        %v828 = vsel %vm347, %v820, 0
        %v831 = vsel %vm347, %v821, 0
        %833 = vmatprep.subr.bf16.mxu0 %v831
        %834 = vmatpush1.bf16.msra.mxu0 %v828
        %835 = vmatprep.subr.bf16.mxu0 0
        %836 = vmatpush1.bf16.msra.mxu0 0
        %837 = vmatprep.subr.bf16.mxu0 0
        %838 = vmatpush1.bf16.msra.mxu0 0
        %839 = vmatprep.subr.bf16.mxu0 0
        %840 = vmatpush1.bf16.msra.mxu0 0
        %841 = vmatprep.subr.bf16.mxu0 0
        %842 = vmatpush1.bf16.msra.mxu0 0
        %843 = vmatprep.subr.bf16.mxu0 0
        %844 = vmatpush1.bf16.msra.mxu0 0
        %845 = vmatprep.subr.bf16.mxu0 0
        %846 = vmatpush1.bf16.msra.mxu0 0
        %847 = vmatprep.subr.bf16.mxu0 0
        %848 = vmatpush1.bf16.msra.mxu0 0
        %849 = vmatprep.subr.bf16.mxu0 0
        %850 = vmatpush1.bf16.msra.mxu0 0
        %851 = vmatprep.subr.bf16.mxu0 0
        %852 = vmatpush1.bf16.msra.mxu0 0
        %853 = vmatprep.subr.bf16.mxu0 0
        %854 = vmatpush1.bf16.msra.mxu0 0
        %855 = vmatprep.subr.bf16.mxu0 0
        %856 = vmatpush1.bf16.msra.mxu0 0
        %857 = vmatprep.subr.bf16.mxu0 0
        %858 = vmatpush1.bf16.msra.mxu0 0
        %859 = vmatprep.subr.bf16.mxu0 0
        %860 = vmatpush1.bf16.msra.mxu0 0
        %861 = vmatprep.subr.bf16.mxu0 0
        %862 = vmatpush1.bf16.msra.mxu0 0
        %863 = vmatprep.subr.bf16.mxu0 0
        %864 = vmatpush1.bf16.msra.mxu0 0
        %865 = vmatprep.mubr.bf16.mxu0 0
        %866 = vmatmul.mubr.bf16.gmra.mrb[0].mxu0 %v825
        %v867 = vpop.f32.mrb[0].mxu0
        %v868 = vadd.f32 0.0, %v867
        %v869 = vpop.f32.mrb[0].mxu0
        %v870 = vadd.f32 0.0, %v869
        %v871 = vpop.f32.mrb[0].mxu0
        %v872 = vpop.f32.mrb[0].mxu0
        %873 = vdwg.mxu0
        %v874 = vadd.f32 %v801, %v868
        %v875 = vadd.f32 %v802, %v870
        %876 = vrot.lane.b32.xlu0 %v298, 111
        %v877 = vpop.permute.xlu0 %876
        %878 = vrot.lane.b32.xlu0 %v299, 111
        %v879 = vpop.permute.xlu0 %878
        %vm880 = vcmp.lt.s32.totalorder %v305, 111
        %v881 = vsel %vm880, %v877, %v879
        %v882 = vsel %vm880, %v879, %v877
        %v883 = vlaneseq
        %v884 = vshrl.u32 %v883, 7
        %v885 = vsub.s32 0, %v884
        %v886 = vrot.slane %v228, %v885
        %v887 = vlaneseq
        %v888 = vshrl.u32 %v887, 7
        %v889 = vsub.s32 0, %v888
        %v890 = vrot.slane %v229, %v889
        %v891 = vmul.f32 %v886, %v881
        %v892 = vmul.f32 %v890, %v882
        %v893 = vpack.c.bf16 %v891, %v891
        %v894 = vpack.c.bf16 %v892, %v892
        %s895 = scalar_lea.vmem %s3, 32
        %v896 = vld [vmem:[%s895] sm:$0xf]
        %v898 = vsel %vm343, %v896, 0
        %v901 = vsel %vm347, %v893, 0
        %v904 = vsel %vm347, %v894, 0
        %906 = vmatprep.subr.bf16.mxu0 %v904
        %907 = vmatpush1.bf16.msra.mxu0 %v901
        %908 = vmatprep.subr.bf16.mxu0 0
        %909 = vmatpush1.bf16.msra.mxu0 0
        %910 = vmatprep.subr.bf16.mxu0 0
        %911 = vmatpush1.bf16.msra.mxu0 0
        %912 = vmatprep.subr.bf16.mxu0 0
        %913 = vmatpush1.bf16.msra.mxu0 0
        %914 = vmatprep.subr.bf16.mxu0 0
        %915 = vmatpush1.bf16.msra.mxu0 0
        %916 = vmatprep.subr.bf16.mxu0 0
        %917 = vmatpush1.bf16.msra.mxu0 0
        %918 = vmatprep.subr.bf16.mxu0 0
        %919 = vmatpush1.bf16.msra.mxu0 0
        %920 = vmatprep.subr.bf16.mxu0 0
        %921 = vmatpush1.bf16.msra.mxu0 0
        %922 = vmatprep.subr.bf16.mxu0 0
        %923 = vmatpush1.bf16.msra.mxu0 0
        %924 = vmatprep.subr.bf16.mxu0 0
        %925 = vmatpush1.bf16.msra.mxu0 0
        %926 = vmatprep.subr.bf16.mxu0 0
        %927 = vmatpush1.bf16.msra.mxu0 0
        %928 = vmatprep.subr.bf16.mxu0 0
        %929 = vmatpush1.bf16.msra.mxu0 0
        %930 = vmatprep.subr.bf16.mxu0 0
        %931 = vmatpush1.bf16.msra.mxu0 0
        %932 = vmatprep.subr.bf16.mxu0 0
        %933 = vmatpush1.bf16.msra.mxu0 0
        %934 = vmatprep.subr.bf16.mxu0 0
        %935 = vmatpush1.bf16.msra.mxu0 0
        %936 = vmatprep.subr.bf16.mxu0 0
        %937 = vmatpush1.bf16.msra.mxu0 0
        %938 = vmatprep.mubr.bf16.mxu0 0
        %939 = vmatmul.mubr.bf16.gmra.mrb[0].mxu0 %v898
        %v940 = vpop.f32.mrb[0].mxu0
        %v941 = vadd.f32 0.0, %v940
        %v942 = vpop.f32.mrb[0].mxu0
        %v943 = vadd.f32 0.0, %v942
        %v944 = vpop.f32.mrb[0].mxu0
        %v945 = vpop.f32.mrb[0].mxu0
        %946 = vdwg.mxu0
        %v947 = vadd.f32 %v874, %v941
        %v948 = vadd.f32 %v875, %v943
        %950 = vset.pattern.permute.xlu0 0
        %951 = vperm.xlu0 %950, %v231
        %v952 = vpop.permute.xlu0 %951
        %v953 = vrot.slane %v242, 4
        %v954 = vrot.slane %v952, 4
        %v955 = vsel %vm248, %v953, %v954
        %v957 = vadd.f32 %v947, %v955
        %v958 = vadd.f32 %v948, %v955
        %v959 = vmul.f32 %v957, 0.1
        %v960 = vmul.f32 %v958, 0.1
        %v961 = vmax.f32 %v957, %v959
        %v962 = vmax.f32 %v958, %v960
        %v963 = vadd.f32 %v224, %v961
        %v964 = vadd.f32 %v225, %v962
        %s965 = scalar_lea.vmem %s2, 2
        %v966 = vld [vmem:[%s965] sm:$0x3]
        %v967 = vpack.c.bf16 %v963, %v963
        %v968 = vpack.c.bf16 %v964, %v964
        %970 = vset.pattern.permute.xlu0 0
        %971 = vperm.xlu0 %970, %v232
        %v972 = vpop.permute.xlu0 %971
        %v975 = vsel %vm244, %v966, 0
        %v978 = vsel %vm248, %v967, 0
        %v981 = vsel %vm248, %v968, 0
        %983 = vmatprep.subr.bf16.mxu0 %v981
        %984 = vmatpush1.bf16.msra.mxu0 %v978
        %985 = vmatprep.subr.bf16.mxu0 0
        %986 = vmatpush1.bf16.msra.mxu0 0
        %987 = vmatprep.subr.bf16.mxu0 0
        %988 = vmatpush1.bf16.msra.mxu0 0
        %989 = vmatprep.subr.bf16.mxu0 0
        %990 = vmatpush1.bf16.msra.mxu0 0
        %991 = vmatprep.subr.bf16.mxu0 0
        %992 = vmatpush1.bf16.msra.mxu0 0
        %993 = vmatprep.subr.bf16.mxu0 0
        %994 = vmatpush1.bf16.msra.mxu0 0
        %995 = vmatprep.subr.bf16.mxu0 0
        %996 = vmatpush1.bf16.msra.mxu0 0
        %997 = vmatprep.subr.bf16.mxu0 0
        %998 = vmatpush1.bf16.msra.mxu0 0
        %999 = vmatprep.subr.bf16.mxu0 0
        %1000 = vmatpush1.bf16.msra.mxu0 0
        %1001 = vmatprep.subr.bf16.mxu0 0
        %1002 = vmatpush1.bf16.msra.mxu0 0
        %1003 = vmatprep.subr.bf16.mxu0 0
        %1004 = vmatpush1.bf16.msra.mxu0 0
        %1005 = vmatprep.subr.bf16.mxu0 0
        %1006 = vmatpush1.bf16.msra.mxu0 0
        %1007 = vmatprep.subr.bf16.mxu0 0
        %1008 = vmatpush1.bf16.msra.mxu0 0
        %1009 = vmatprep.subr.bf16.mxu0 0
        %1010 = vmatpush1.bf16.msra.mxu0 0
        %1011 = vmatprep.subr.bf16.mxu0 0
        %1012 = vmatpush1.bf16.msra.mxu0 0
        %1013 = vmatprep.subr.bf16.mxu0 0
        %1014 = vmatpush1.bf16.msra.mxu0 0
        %1015 = vmatprep.mubr.bf16.mxu0 0
        %1016 = vmatmul.mubr.bf16.gmra.mrb[0].mxu0 %v975
        %v1017 = vpop.f32.mrb[0].mxu0
        %v1018 = vadd.f32 %v972, %v1017
        %v1019 = vpop.f32.mrb[0].mxu0
        %v1020 = vadd.f32 %v972, %v1019
        %v1021 = vpop.f32.mrb[0].mxu0
        %v1022 = vpop.f32.mrb[0].mxu0
        %1023 = vdwg.mxu0
        %v1024 = vmul.f32 %v1018, 0.1
        %v1025 = vmul.f32 %v1020, 0.1
        %v1026 = vmax.f32 %v1018, %v1024
        %v1027 = vmax.f32 %v1020, %v1025
        %1028 = vrot.lane.b32.xlu0 %v1026, 17
        %v1029 = vpop.permute.xlu0 %1028
        %1030 = vrot.lane.b32.xlu0 %v1027, 17
        %v1031 = vpop.permute.xlu0 %1030
        %v1032 = vsel %vm306, %v1029, %v1031
        %v1033 = vsel %vm306, %v1031, %v1029
        %v1034 = vmul.f32 %v312, %v1033
        %v1035 = vmul.f32 %v316, %v1032
        %v1036 = vpack.c.bf16 %v1034, %v1034
        %v1037 = vpack.c.bf16 %v1035, %v1035
        %s1038 = scalar_lea.vmem %s3, 36
        %v1039 = vld [vmem:[%s1038] sm:$0xf]
        %1040 = vrot.lane.b32.xlu0 %v1026, 16
        %v1041 = vpop.permute.xlu0 %1040
        %1042 = vrot.lane.b32.xlu0 %v1027, 16
        %v1043 = vpop.permute.xlu0 %1042
        %v1044 = vsel %vm326, %v1041, %v1043
        %v1045 = vsel %vm326, %v1043, %v1041
        %v1046 = vmul.f32 %v332, %v1045
        %v1047 = vmul.f32 %v336, %v1044
        %v1048 = vpack.c.bf16 %v1046, %v1046
        %v1049 = vpack.c.bf16 %v1047, %v1047
        %s1050 = scalar_lea.vmem %s3, 40
        %v1051 = vld [vmem:[%s1050] sm:$0xf]
        %v1053 = vsel %vm343, %v1051, 0
        %v1056 = vsel %vm347, %v1048, 0
        %v1059 = vsel %vm347, %v1049, 0
        %1061 = vmatprep.subr.bf16.mxu0 %v1059
        %1062 = vmatpush1.bf16.msra.mxu0 %v1056
        %1063 = vmatprep.subr.bf16.mxu0 0
        %1064 = vmatpush1.bf16.msra.mxu0 0
        %1065 = vmatprep.subr.bf16.mxu0 0
        %1066 = vmatpush1.bf16.msra.mxu0 0
        %1067 = vmatprep.subr.bf16.mxu0 0
        %1068 = vmatpush1.bf16.msra.mxu0 0
        %1069 = vmatprep.subr.bf16.mxu0 0
        %1070 = vmatpush1.bf16.msra.mxu0 0
        %1071 = vmatprep.subr.bf16.mxu0 0
        %1072 = vmatpush1.bf16.msra.mxu0 0
        %1073 = vmatprep.subr.bf16.mxu0 0
        %1074 = vmatpush1.bf16.msra.mxu0 0
        %1075 = vmatprep.subr.bf16.mxu0 0
        %1076 = vmatpush1.bf16.msra.mxu0 0
        %1077 = vmatprep.subr.bf16.mxu0 0
        %1078 = vmatpush1.bf16.msra.mxu0 0
        %1079 = vmatprep.subr.bf16.mxu0 0
        %1080 = vmatpush1.bf16.msra.mxu0 0
        %1081 = vmatprep.subr.bf16.mxu0 0
        %1082 = vmatpush1.bf16.msra.mxu0 0
        %1083 = vmatprep.subr.bf16.mxu0 0
        %1084 = vmatpush1.bf16.msra.mxu0 0
        %1085 = vmatprep.subr.bf16.mxu0 0
        %1086 = vmatpush1.bf16.msra.mxu0 0
        %1087 = vmatprep.subr.bf16.mxu0 0
        %1088 = vmatpush1.bf16.msra.mxu0 0
        %1089 = vmatprep.subr.bf16.mxu0 0
        %1090 = vmatpush1.bf16.msra.mxu0 0
        %1091 = vmatprep.subr.bf16.mxu0 0
        %1092 = vmatpush1.bf16.msra.mxu0 0
        %1093 = vmatprep.mubr.bf16.mxu0 0
        %1094 = vmatmul.mubr.bf16.gmra.mrb[0].mxu0 %v1053
        %v1095 = vpop.f32.mrb[0].mxu0
        %v1096 = vadd.f32 0.0, %v1095
        %v1097 = vpop.f32.mrb[0].mxu0
        %v1098 = vadd.f32 0.0, %v1097
        %v1099 = vpop.f32.mrb[0].mxu0
        %v1100 = vpop.f32.mrb[0].mxu0
        %1101 = vdwg.mxu0
        %v1103 = vsel %vm343, %v1039, 0
        %v1106 = vsel %vm347, %v1036, 0
        %v1109 = vsel %vm347, %v1037, 0
        %1111 = vmatprep.subr.bf16.mxu0 %v1109
        %1112 = vmatpush1.bf16.msra.mxu0 %v1106
        %1113 = vmatprep.subr.bf16.mxu0 0
        %1114 = vmatpush1.bf16.msra.mxu0 0
        %1115 = vmatprep.subr.bf16.mxu0 0
        %1116 = vmatpush1.bf16.msra.mxu0 0
        %1117 = vmatprep.subr.bf16.mxu0 0
        %1118 = vmatpush1.bf16.msra.mxu0 0
        %1119 = vmatprep.subr.bf16.mxu0 0
        %1120 = vmatpush1.bf16.msra.mxu0 0
        %1121 = vmatprep.subr.bf16.mxu0 0
        %1122 = vmatpush1.bf16.msra.mxu0 0
        %1123 = vmatprep.subr.bf16.mxu0 0
        %1124 = vmatpush1.bf16.msra.mxu0 0
        %1125 = vmatprep.subr.bf16.mxu0 0
        %1126 = vmatpush1.bf16.msra.mxu0 0
        %1127 = vmatprep.subr.bf16.mxu0 0
        %1128 = vmatpush1.bf16.msra.mxu0 0
        %1129 = vmatprep.subr.bf16.mxu0 0
        %1130 = vmatpush1.bf16.msra.mxu0 0
        %1131 = vmatprep.subr.bf16.mxu0 0
        %1132 = vmatpush1.bf16.msra.mxu0 0
        %1133 = vmatprep.subr.bf16.mxu0 0
        %1134 = vmatpush1.bf16.msra.mxu0 0
        %1135 = vmatprep.subr.bf16.mxu0 0
        %1136 = vmatpush1.bf16.msra.mxu0 0
        %1137 = vmatprep.subr.bf16.mxu0 0
        %1138 = vmatpush1.bf16.msra.mxu0 0
        %1139 = vmatprep.subr.bf16.mxu0 0
        %1140 = vmatpush1.bf16.msra.mxu0 0
        %1141 = vmatprep.subr.bf16.mxu0 0
        %1142 = vmatpush1.bf16.msra.mxu0 0
        %1143 = vmatprep.mubr.bf16.mxu0 0
        %1144 = vmatmul.mubr.bf16.gmra.mrb[0].mxu0 %v1103
        %v1145 = vpop.f32.mrb[0].mxu0
        %v1146 = vadd.f32 %v1096, %v1145
        %v1147 = vpop.f32.mrb[0].mxu0
        %v1148 = vadd.f32 %v1098, %v1147
        %v1149 = vpop.f32.mrb[0].mxu0
        %v1150 = vpop.f32.mrb[0].mxu0
        %1151 = vdwg.mxu0
        %1152 = vrot.lane.b32.xlu0 %v1026, 15
        %v1153 = vpop.permute.xlu0 %1152
        %1154 = vrot.lane.b32.xlu0 %v1027, 15
        %v1155 = vpop.permute.xlu0 %1154
        %v1156 = vsel %vm449, %v1153, %v1155
        %v1157 = vsel %vm449, %v1155, %v1153
        %v1158 = vmul.f32 %v455, %v1157
        %v1159 = vmul.f32 %v459, %v1156
        %v1160 = vpack.c.bf16 %v1158, %v1158
        %v1161 = vpack.c.bf16 %v1159, %v1159
        %s1162 = scalar_lea.vmem %s3, 44
        %v1163 = vld [vmem:[%s1162] sm:$0xf]
        %v1165 = vsel %vm343, %v1163, 0
        %v1168 = vsel %vm347, %v1160, 0
        %v1171 = vsel %vm347, %v1161, 0
        %1173 = vmatprep.subr.bf16.mxu0 %v1171
        %1174 = vmatpush1.bf16.msra.mxu0 %v1168
        %1175 = vmatprep.subr.bf16.mxu0 0
        %1176 = vmatpush1.bf16.msra.mxu0 0
        %1177 = vmatprep.subr.bf16.mxu0 0
        %1178 = vmatpush1.bf16.msra.mxu0 0
        %1179 = vmatprep.subr.bf16.mxu0 0
        %1180 = vmatpush1.bf16.msra.mxu0 0
        %1181 = vmatprep.subr.bf16.mxu0 0
        %1182 = vmatpush1.bf16.msra.mxu0 0
        %1183 = vmatprep.subr.bf16.mxu0 0
        %1184 = vmatpush1.bf16.msra.mxu0 0
        %1185 = vmatprep.subr.bf16.mxu0 0
        %1186 = vmatpush1.bf16.msra.mxu0 0
        %1187 = vmatprep.subr.bf16.mxu0 0
        %1188 = vmatpush1.bf16.msra.mxu0 0
        %1189 = vmatprep.subr.bf16.mxu0 0
        %1190 = vmatpush1.bf16.msra.mxu0 0
        %1191 = vmatprep.subr.bf16.mxu0 0
        %1192 = vmatpush1.bf16.msra.mxu0 0
        %1193 = vmatprep.subr.bf16.mxu0 0
        %1194 = vmatpush1.bf16.msra.mxu0 0
        %1195 = vmatprep.subr.bf16.mxu0 0
        %1196 = vmatpush1.bf16.msra.mxu0 0
        %1197 = vmatprep.subr.bf16.mxu0 0
        %1198 = vmatpush1.bf16.msra.mxu0 0
        %1199 = vmatprep.subr.bf16.mxu0 0
        %1200 = vmatpush1.bf16.msra.mxu0 0
        %1201 = vmatprep.subr.bf16.mxu0 0
        %1202 = vmatpush1.bf16.msra.mxu0 0
        %1203 = vmatprep.subr.bf16.mxu0 0
        %1204 = vmatpush1.bf16.msra.mxu0 0
        %1205 = vmatprep.mubr.bf16.mxu0 0
        %1206 = vmatmul.mubr.bf16.gmra.mrb[0].mxu0 %v1165
        %v1207 = vpop.f32.mrb[0].mxu0
        %v1208 = vadd.f32 0.0, %v1207
        %v1209 = vpop.f32.mrb[0].mxu0
        %v1210 = vadd.f32 0.0, %v1209
        %v1211 = vpop.f32.mrb[0].mxu0
        %v1212 = vpop.f32.mrb[0].mxu0
        %1213 = vdwg.mxu0
        %v1214 = vadd.f32 %v1146, %v1208
        %v1215 = vadd.f32 %v1148, %v1210
        %1216 = vrot.lane.b32.xlu0 %v1026, 1
        %v1217 = vpop.permute.xlu0 %1216
        %1218 = vrot.lane.b32.xlu0 %v1027, 1
        %v1219 = vpop.permute.xlu0 %1218
        %v1220 = vsel %vm522, %v1217, %v1219
        %v1221 = vsel %vm522, %v1219, %v1217
        %v1222 = vmul.f32 %v528, %v1221
        %v1223 = vmul.f32 %v532, %v1220
        %v1224 = vpack.c.bf16 %v1222, %v1222
        %v1225 = vpack.c.bf16 %v1223, %v1223
        %s1226 = scalar_lea.vmem %s3, 48
        %v1227 = vld [vmem:[%s1226] sm:$0xf]
        %v1229 = vsel %vm343, %v1227, 0
        %v1232 = vsel %vm347, %v1224, 0
        %v1235 = vsel %vm347, %v1225, 0
        %1237 = vmatprep.subr.bf16.mxu0 %v1235
        %1238 = vmatpush1.bf16.msra.mxu0 %v1232
        %1239 = vmatprep.subr.bf16.mxu0 0
        %1240 = vmatpush1.bf16.msra.mxu0 0
        %1241 = vmatprep.subr.bf16.mxu0 0
        %1242 = vmatpush1.bf16.msra.mxu0 0
        %1243 = vmatprep.subr.bf16.mxu0 0
        %1244 = vmatpush1.bf16.msra.mxu0 0
        %1245 = vmatprep.subr.bf16.mxu0 0
        %1246 = vmatpush1.bf16.msra.mxu0 0
        %1247 = vmatprep.subr.bf16.mxu0 0
        %1248 = vmatpush1.bf16.msra.mxu0 0
        %1249 = vmatprep.subr.bf16.mxu0 0
        %1250 = vmatpush1.bf16.msra.mxu0 0
        %1251 = vmatprep.subr.bf16.mxu0 0
        %1252 = vmatpush1.bf16.msra.mxu0 0
        %1253 = vmatprep.subr.bf16.mxu0 0
        %1254 = vmatpush1.bf16.msra.mxu0 0
        %1255 = vmatprep.subr.bf16.mxu0 0
        %1256 = vmatpush1.bf16.msra.mxu0 0
        %1257 = vmatprep.subr.bf16.mxu0 0
        %1258 = vmatpush1.bf16.msra.mxu0 0
        %1259 = vmatprep.subr.bf16.mxu0 0
        %1260 = vmatpush1.bf16.msra.mxu0 0
        %1261 = vmatprep.subr.bf16.mxu0 0
        %1262 = vmatpush1.bf16.msra.mxu0 0
        %1263 = vmatprep.subr.bf16.mxu0 0
        %1264 = vmatpush1.bf16.msra.mxu0 0
        %1265 = vmatprep.subr.bf16.mxu0 0
        %1266 = vmatpush1.bf16.msra.mxu0 0
        %1267 = vmatprep.subr.bf16.mxu0 0
        %1268 = vmatpush1.bf16.msra.mxu0 0
        %1269 = vmatprep.mubr.bf16.mxu0 0
        %1270 = vmatmul.mubr.bf16.gmra.mrb[0].mxu0 %v1229
        %v1271 = vpop.f32.mrb[0].mxu0
        %v1272 = vadd.f32 0.0, %v1271
        %v1273 = vpop.f32.mrb[0].mxu0
        %v1274 = vadd.f32 0.0, %v1273
        %v1275 = vpop.f32.mrb[0].mxu0
        %v1276 = vpop.f32.mrb[0].mxu0
        %1277 = vdwg.mxu0
        %v1278 = vadd.f32 %v1214, %v1272
        %v1279 = vadd.f32 %v1215, %v1274
        %v1280 = vmul.f32 %v594, %v1026
        %v1281 = vmul.f32 %v598, %v1027
        %v1282 = vpack.c.bf16 %v1280, %v1280
        %v1283 = vpack.c.bf16 %v1281, %v1281
        %s1284 = scalar_lea.vmem %s3, 52
        %v1285 = vld [vmem:[%s1284] sm:$0xf]
        %v1287 = vsel %vm343, %v1285, 0
        %v1290 = vsel %vm347, %v1282, 0
        %v1293 = vsel %vm347, %v1283, 0
        %1295 = vmatprep.subr.bf16.mxu0 %v1293
        %1296 = vmatpush1.bf16.msra.mxu0 %v1290
        %1297 = vmatprep.subr.bf16.mxu0 0
        %1298 = vmatpush1.bf16.msra.mxu0 0
        %1299 = vmatprep.subr.bf16.mxu0 0
        %1300 = vmatpush1.bf16.msra.mxu0 0
        %1301 = vmatprep.subr.bf16.mxu0 0
        %1302 = vmatpush1.bf16.msra.mxu0 0
        %1303 = vmatprep.subr.bf16.mxu0 0
        %1304 = vmatpush1.bf16.msra.mxu0 0
        %1305 = vmatprep.subr.bf16.mxu0 0
        %1306 = vmatpush1.bf16.msra.mxu0 0
        %1307 = vmatprep.subr.bf16.mxu0 0
        %1308 = vmatpush1.bf16.msra.mxu0 0
        %1309 = vmatprep.subr.bf16.mxu0 0
        %1310 = vmatpush1.bf16.msra.mxu0 0
        %1311 = vmatprep.subr.bf16.mxu0 0
        %1312 = vmatpush1.bf16.msra.mxu0 0
        %1313 = vmatprep.subr.bf16.mxu0 0
        %1314 = vmatpush1.bf16.msra.mxu0 0
        %1315 = vmatprep.subr.bf16.mxu0 0
        %1316 = vmatpush1.bf16.msra.mxu0 0
        %1317 = vmatprep.subr.bf16.mxu0 0
        %1318 = vmatpush1.bf16.msra.mxu0 0
        %1319 = vmatprep.subr.bf16.mxu0 0
        %1320 = vmatpush1.bf16.msra.mxu0 0
        %1321 = vmatprep.subr.bf16.mxu0 0
        %1322 = vmatpush1.bf16.msra.mxu0 0
        %1323 = vmatprep.subr.bf16.mxu0 0
        %1324 = vmatpush1.bf16.msra.mxu0 0
        %1325 = vmatprep.subr.bf16.mxu0 0
        %1326 = vmatpush1.bf16.msra.mxu0 0
        %1327 = vmatprep.mubr.bf16.mxu0 0
        %1328 = vmatmul.mubr.bf16.gmra.mrb[0].mxu0 %v1287
        %v1329 = vpop.f32.mrb[0].mxu0
        %v1330 = vadd.f32 0.0, %v1329
        %v1331 = vpop.f32.mrb[0].mxu0
        %v1332 = vadd.f32 0.0, %v1331
        %v1333 = vpop.f32.mrb[0].mxu0
        %v1334 = vpop.f32.mrb[0].mxu0
        %1335 = vdwg.mxu0
        %v1336 = vadd.f32 %v1278, %v1330
        %v1337 = vadd.f32 %v1279, %v1332
        %1338 = vrot.lane.b32.xlu0 %v1026, 127
        %v1339 = vpop.permute.xlu0 %1338
        %1340 = vrot.lane.b32.xlu0 %v1027, 127
        %v1341 = vpop.permute.xlu0 %1340
        %v1342 = vsel %vm661, %v1339, %v1341
        %v1343 = vsel %vm661, %v1341, %v1339
        %v1344 = vmul.f32 %v667, %v1342
        %v1345 = vmul.f32 %v671, %v1343
        %v1346 = vpack.c.bf16 %v1344, %v1344
        %v1347 = vpack.c.bf16 %v1345, %v1345
        %s1348 = scalar_lea.vmem %s3, 56
        %v1349 = vld [vmem:[%s1348] sm:$0xf]
        %v1351 = vsel %vm343, %v1349, 0
        %v1354 = vsel %vm347, %v1346, 0
        %v1357 = vsel %vm347, %v1347, 0
        %1359 = vmatprep.subr.bf16.mxu0 %v1357
        %1360 = vmatpush1.bf16.msra.mxu0 %v1354
        %1361 = vmatprep.subr.bf16.mxu0 0
        %1362 = vmatpush1.bf16.msra.mxu0 0
        %1363 = vmatprep.subr.bf16.mxu0 0
        %1364 = vmatpush1.bf16.msra.mxu0 0
        %1365 = vmatprep.subr.bf16.mxu0 0
        %1366 = vmatpush1.bf16.msra.mxu0 0
        %1367 = vmatprep.subr.bf16.mxu0 0
        %1368 = vmatpush1.bf16.msra.mxu0 0
        %1369 = vmatprep.subr.bf16.mxu0 0
        %1370 = vmatpush1.bf16.msra.mxu0 0
        %1371 = vmatprep.subr.bf16.mxu0 0
        %1372 = vmatpush1.bf16.msra.mxu0 0
        %1373 = vmatprep.subr.bf16.mxu0 0
        %1374 = vmatpush1.bf16.msra.mxu0 0
        %1375 = vmatprep.subr.bf16.mxu0 0
        %1376 = vmatpush1.bf16.msra.mxu0 0
        %1377 = vmatprep.subr.bf16.mxu0 0
        %1378 = vmatpush1.bf16.msra.mxu0 0
        %1379 = vmatprep.subr.bf16.mxu0 0
        %1380 = vmatpush1.bf16.msra.mxu0 0
        %1381 = vmatprep.subr.bf16.mxu0 0
        %1382 = vmatpush1.bf16.msra.mxu0 0
        %1383 = vmatprep.subr.bf16.mxu0 0
        %1384 = vmatpush1.bf16.msra.mxu0 0
        %1385 = vmatprep.subr.bf16.mxu0 0
        %1386 = vmatpush1.bf16.msra.mxu0 0
        %1387 = vmatprep.subr.bf16.mxu0 0
        %1388 = vmatpush1.bf16.msra.mxu0 0
        %1389 = vmatprep.subr.bf16.mxu0 0
        %1390 = vmatpush1.bf16.msra.mxu0 0
        %1391 = vmatprep.mubr.bf16.mxu0 0
        %1392 = vmatmul.mubr.bf16.gmra.mrb[0].mxu0 %v1351
        %v1393 = vpop.f32.mrb[0].mxu0
        %v1394 = vadd.f32 0.0, %v1393
        %v1395 = vpop.f32.mrb[0].mxu0
        %v1396 = vadd.f32 0.0, %v1395
        %v1397 = vpop.f32.mrb[0].mxu0
        %v1398 = vpop.f32.mrb[0].mxu0
        %1399 = vdwg.mxu0
        %v1400 = vadd.f32 %v1336, %v1394
        %v1401 = vadd.f32 %v1337, %v1396
        %1402 = vrot.lane.b32.xlu0 %v1026, 113
        %v1403 = vpop.permute.xlu0 %1402
        %1404 = vrot.lane.b32.xlu0 %v1027, 113
        %v1405 = vpop.permute.xlu0 %1404
        %v1406 = vsel %vm734, %v1403, %v1405
        %v1407 = vsel %vm734, %v1405, %v1403
        %v1408 = vmul.f32 %v740, %v1406
        %v1409 = vmul.f32 %v744, %v1407
        %v1410 = vpack.c.bf16 %v1408, %v1408
        %v1411 = vpack.c.bf16 %v1409, %v1409
        %s1412 = scalar_lea.vmem %s3, 60
        %v1413 = vld [vmem:[%s1412] sm:$0xf]
        %v1415 = vsel %vm343, %v1413, 0
        %v1418 = vsel %vm347, %v1410, 0
        %v1421 = vsel %vm347, %v1411, 0
        %1423 = vmatprep.subr.bf16.mxu0 %v1421
        %1424 = vmatpush1.bf16.msra.mxu0 %v1418
        %1425 = vmatprep.subr.bf16.mxu0 0
        %1426 = vmatpush1.bf16.msra.mxu0 0
        %1427 = vmatprep.subr.bf16.mxu0 0
        %1428 = vmatpush1.bf16.msra.mxu0 0
        %1429 = vmatprep.subr.bf16.mxu0 0
        %1430 = vmatpush1.bf16.msra.mxu0 0
        %1431 = vmatprep.subr.bf16.mxu0 0
        %1432 = vmatpush1.bf16.msra.mxu0 0
        %1433 = vmatprep.subr.bf16.mxu0 0
        %1434 = vmatpush1.bf16.msra.mxu0 0
        %1435 = vmatprep.subr.bf16.mxu0 0
        %1436 = vmatpush1.bf16.msra.mxu0 0
        %1437 = vmatprep.subr.bf16.mxu0 0
        %1438 = vmatpush1.bf16.msra.mxu0 0
        %1439 = vmatprep.subr.bf16.mxu0 0
        %1440 = vmatpush1.bf16.msra.mxu0 0
        %1441 = vmatprep.subr.bf16.mxu0 0
        %1442 = vmatpush1.bf16.msra.mxu0 0
        %1443 = vmatprep.subr.bf16.mxu0 0
        %1444 = vmatpush1.bf16.msra.mxu0 0
        %1445 = vmatprep.subr.bf16.mxu0 0
        %1446 = vmatpush1.bf16.msra.mxu0 0
        %1447 = vmatprep.subr.bf16.mxu0 0
        %1448 = vmatpush1.bf16.msra.mxu0 0
        %1449 = vmatprep.subr.bf16.mxu0 0
        %1450 = vmatpush1.bf16.msra.mxu0 0
        %1451 = vmatprep.subr.bf16.mxu0 0
        %1452 = vmatpush1.bf16.msra.mxu0 0
        %1453 = vmatprep.subr.bf16.mxu0 0
        %1454 = vmatpush1.bf16.msra.mxu0 0
        %1455 = vmatprep.mubr.bf16.mxu0 0
        %1456 = vmatmul.mubr.bf16.gmra.mrb[0].mxu0 %v1415
        %v1457 = vpop.f32.mrb[0].mxu0
        %v1458 = vadd.f32 0.0, %v1457
        %v1459 = vpop.f32.mrb[0].mxu0
        %v1460 = vadd.f32 0.0, %v1459
        %v1461 = vpop.f32.mrb[0].mxu0
        %v1462 = vpop.f32.mrb[0].mxu0
        %1463 = vdwg.mxu0
        %v1464 = vadd.f32 %v1400, %v1458
        %v1465 = vadd.f32 %v1401, %v1460
        %1466 = vrot.lane.b32.xlu0 %v1026, 112
        %v1467 = vpop.permute.xlu0 %1466
        %1468 = vrot.lane.b32.xlu0 %v1027, 112
        %v1469 = vpop.permute.xlu0 %1468
        %v1470 = vsel %vm807, %v1467, %v1469
        %v1471 = vsel %vm807, %v1469, %v1467
        %v1472 = vmul.f32 %v813, %v1470
        %v1473 = vmul.f32 %v817, %v1471
        %v1474 = vpack.c.bf16 %v1472, %v1472
        %v1475 = vpack.c.bf16 %v1473, %v1473
        %s1476 = scalar_lea.vmem %s3, 64
        %v1477 = vld [vmem:[%s1476] sm:$0xf]
        %v1479 = vsel %vm343, %v1477, 0
        %v1482 = vsel %vm347, %v1474, 0
        %v1485 = vsel %vm347, %v1475, 0
        %1487 = vmatprep.subr.bf16.mxu0 %v1485
        %1488 = vmatpush1.bf16.msra.mxu0 %v1482
        %1489 = vmatprep.subr.bf16.mxu0 0
        %1490 = vmatpush1.bf16.msra.mxu0 0
        %1491 = vmatprep.subr.bf16.mxu0 0
        %1492 = vmatpush1.bf16.msra.mxu0 0
        %1493 = vmatprep.subr.bf16.mxu0 0
        %1494 = vmatpush1.bf16.msra.mxu0 0
        %1495 = vmatprep.subr.bf16.mxu0 0
        %1496 = vmatpush1.bf16.msra.mxu0 0
        %1497 = vmatprep.subr.bf16.mxu0 0
        %1498 = vmatpush1.bf16.msra.mxu0 0
        %1499 = vmatprep.subr.bf16.mxu0 0
        %1500 = vmatpush1.bf16.msra.mxu0 0
        %1501 = vmatprep.subr.bf16.mxu0 0
        %1502 = vmatpush1.bf16.msra.mxu0 0
        %1503 = vmatprep.subr.bf16.mxu0 0
        %1504 = vmatpush1.bf16.msra.mxu0 0
        %1505 = vmatprep.subr.bf16.mxu0 0
        %1506 = vmatpush1.bf16.msra.mxu0 0
        %1507 = vmatprep.subr.bf16.mxu0 0
        %1508 = vmatpush1.bf16.msra.mxu0 0
        %1509 = vmatprep.subr.bf16.mxu0 0
        %1510 = vmatpush1.bf16.msra.mxu0 0
        %1511 = vmatprep.subr.bf16.mxu0 0
        %1512 = vmatpush1.bf16.msra.mxu0 0
        %1513 = vmatprep.subr.bf16.mxu0 0
        %1514 = vmatpush1.bf16.msra.mxu0 0
        %1515 = vmatprep.subr.bf16.mxu0 0
        %1516 = vmatpush1.bf16.msra.mxu0 0
        %1517 = vmatprep.subr.bf16.mxu0 0
        %1518 = vmatpush1.bf16.msra.mxu0 0
        %1519 = vmatprep.mubr.bf16.mxu0 0
        %1520 = vmatmul.mubr.bf16.gmra.mrb[0].mxu0 %v1479
        %v1521 = vpop.f32.mrb[0].mxu0
        %v1522 = vadd.f32 0.0, %v1521
        %v1523 = vpop.f32.mrb[0].mxu0
        %v1524 = vadd.f32 0.0, %v1523
        %v1525 = vpop.f32.mrb[0].mxu0
        %v1526 = vpop.f32.mrb[0].mxu0
        %1527 = vdwg.mxu0
        %v1528 = vadd.f32 %v1464, %v1522
        %v1529 = vadd.f32 %v1465, %v1524
        %1530 = vrot.lane.b32.xlu0 %v1026, 111
        %v1531 = vpop.permute.xlu0 %1530
        %1532 = vrot.lane.b32.xlu0 %v1027, 111
        %v1533 = vpop.permute.xlu0 %1532
        %v1534 = vsel %vm880, %v1531, %v1533
        %v1535 = vsel %vm880, %v1533, %v1531
        %v1536 = vmul.f32 %v886, %v1534
        %v1537 = vmul.f32 %v890, %v1535
        %v1538 = vpack.c.bf16 %v1536, %v1536
        %v1539 = vpack.c.bf16 %v1537, %v1537
        %s1540 = scalar_lea.vmem %s3, 68
        %v1541 = vld [vmem:[%s1540] sm:$0xf]
        %v1543 = vsel %vm343, %v1541, 0
        %v1546 = vsel %vm347, %v1538, 0
        %v1549 = vsel %vm347, %v1539, 0
        %1551 = vmatprep.subr.bf16.mxu0 %v1549
        %1552 = vmatpush1.bf16.msra.mxu0 %v1546
        %1553 = vmatprep.subr.bf16.mxu0 0
        %1554 = vmatpush1.bf16.msra.mxu0 0
        %1555 = vmatprep.subr.bf16.mxu0 0
        %1556 = vmatpush1.bf16.msra.mxu0 0
        %1557 = vmatprep.subr.bf16.mxu0 0
        %1558 = vmatpush1.bf16.msra.mxu0 0
        %1559 = vmatprep.subr.bf16.mxu0 0
        %1560 = vmatpush1.bf16.msra.mxu0 0
        %1561 = vmatprep.subr.bf16.mxu0 0
        %1562 = vmatpush1.bf16.msra.mxu0 0
        %1563 = vmatprep.subr.bf16.mxu0 0
        %1564 = vmatpush1.bf16.msra.mxu0 0
        %1565 = vmatprep.subr.bf16.mxu0 0
        %1566 = vmatpush1.bf16.msra.mxu0 0
        %1567 = vmatprep.subr.bf16.mxu0 0
        %1568 = vmatpush1.bf16.msra.mxu0 0
        %1569 = vmatprep.subr.bf16.mxu0 0
        %1570 = vmatpush1.bf16.msra.mxu0 0
        %1571 = vmatprep.subr.bf16.mxu0 0
        %1572 = vmatpush1.bf16.msra.mxu0 0
        %1573 = vmatprep.subr.bf16.mxu0 0
        %1574 = vmatpush1.bf16.msra.mxu0 0
        %1575 = vmatprep.subr.bf16.mxu0 0
        %1576 = vmatpush1.bf16.msra.mxu0 0
        %1577 = vmatprep.subr.bf16.mxu0 0
        %1578 = vmatpush1.bf16.msra.mxu0 0
        %1579 = vmatprep.subr.bf16.mxu0 0
        %1580 = vmatpush1.bf16.msra.mxu0 0
        %1581 = vmatprep.subr.bf16.mxu0 0
        %1582 = vmatpush1.bf16.msra.mxu0 0
        %1583 = vmatprep.mubr.bf16.mxu0 0
        %1584 = vmatmul.mubr.bf16.gmra.mrb[0].mxu0 %v1543
        %v1585 = vpop.f32.mrb[0].mxu0
        %v1586 = vadd.f32 0.0, %v1585
        %v1587 = vpop.f32.mrb[0].mxu0
        %v1588 = vadd.f32 0.0, %v1587
        %v1589 = vpop.f32.mrb[0].mxu0
        %v1590 = vpop.f32.mrb[0].mxu0
        %1591 = vdwg.mxu0
        %v1592 = vadd.f32 %v1528, %v1586
        %v1593 = vadd.f32 %v1529, %v1588
        %1595 = vset.pattern.permute.xlu0 0
        %1596 = vperm.xlu0 %1595, %v233
        %v1597 = vpop.permute.xlu0 %1596
        %v1598 = vrot.slane %v972, 4
        %v1599 = vrot.slane %v1597, 4
        %v1600 = vsel %vm248, %v1598, %v1599
        %v1602 = vadd.f32 %v1592, %v1600
        %v1603 = vadd.f32 %v1593, %v1600
        %v1604 = vmul.f32 %v1602, 0.1
        %v1605 = vmul.f32 %v1603, 0.1
        %v1606 = vmax.f32 %v1602, %v1604
        %v1607 = vmax.f32 %v1603, %v1605
        %v1608 = vadd.f32 %v963, %v1606
        %v1609 = vadd.f32 %v964, %v1607
        %s1610 = scalar_lea.vmem %s2, 4
        %v1611 = vld [vmem:[%s1610] sm:$0x3]
        %v1612 = vpack.c.bf16 %v1608, %v1608
        %v1613 = vpack.c.bf16 %v1609, %v1609
        %1615 = vset.pattern.permute.xlu0 0
        %1616 = vperm.xlu0 %1615, %v234
        %v1617 = vpop.permute.xlu0 %1616
        %v1620 = vsel %vm244, %v1611, 0
        %v1623 = vsel %vm248, %v1612, 0
        %v1626 = vsel %vm248, %v1613, 0
        %1628 = vmatprep.subr.bf16.mxu0 %v1626
        %1629 = vmatpush1.bf16.msra.mxu0 %v1623
        %1630 = vmatprep.subr.bf16.mxu0 0
        %1631 = vmatpush1.bf16.msra.mxu0 0
        %1632 = vmatprep.subr.bf16.mxu0 0
        %1633 = vmatpush1.bf16.msra.mxu0 0
        %1634 = vmatprep.subr.bf16.mxu0 0
        %1635 = vmatpush1.bf16.msra.mxu0 0
        %1636 = vmatprep.subr.bf16.mxu0 0
        %1637 = vmatpush1.bf16.msra.mxu0 0
        %1638 = vmatprep.subr.bf16.mxu0 0
        %1639 = vmatpush1.bf16.msra.mxu0 0
        %1640 = vmatprep.subr.bf16.mxu0 0
        %1641 = vmatpush1.bf16.msra.mxu0 0
        %1642 = vmatprep.subr.bf16.mxu0 0
        %1643 = vmatpush1.bf16.msra.mxu0 0
        %1644 = vmatprep.subr.bf16.mxu0 0
        %1645 = vmatpush1.bf16.msra.mxu0 0
        %1646 = vmatprep.subr.bf16.mxu0 0
        %1647 = vmatpush1.bf16.msra.mxu0 0
        %1648 = vmatprep.subr.bf16.mxu0 0
        %1649 = vmatpush1.bf16.msra.mxu0 0
        %1650 = vmatprep.subr.bf16.mxu0 0
        %1651 = vmatpush1.bf16.msra.mxu0 0
        %1652 = vmatprep.subr.bf16.mxu0 0
        %1653 = vmatpush1.bf16.msra.mxu0 0
        %1654 = vmatprep.subr.bf16.mxu0 0
        %1655 = vmatpush1.bf16.msra.mxu0 0
        %1656 = vmatprep.subr.bf16.mxu0 0
        %1657 = vmatpush1.bf16.msra.mxu0 0
        %1658 = vmatprep.subr.bf16.mxu0 0
        %1659 = vmatpush1.bf16.msra.mxu0 0
        %1660 = vmatprep.mubr.bf16.mxu0 0
        %1661 = vmatmul.mubr.bf16.gmra.mrb[0].mxu0 %v1620
        %v1662 = vpop.f32.mrb[0].mxu0
        %v1663 = vadd.f32 %v1617, %v1662
        %v1664 = vpop.f32.mrb[0].mxu0
        %v1665 = vadd.f32 %v1617, %v1664
        %v1666 = vpop.f32.mrb[0].mxu0
        %v1667 = vpop.f32.mrb[0].mxu0
        %1668 = vdwg.mxu0
        %v1669 = vmul.f32 %v1663, 0.1
        %v1670 = vmul.f32 %v1665, 0.1
        %v1671 = vmax.f32 %v1663, %v1669
        %v1672 = vmax.f32 %v1665, %v1670
        %1673 = vrot.lane.b32.xlu0 %v1671, 17
        %v1674 = vpop.permute.xlu0 %1673
        %1675 = vrot.lane.b32.xlu0 %v1672, 17
        %v1676 = vpop.permute.xlu0 %1675
        %v1677 = vsel %vm306, %v1674, %v1676
        %v1678 = vsel %vm306, %v1676, %v1674
        %v1679 = vmul.f32 %v312, %v1678
        %v1680 = vmul.f32 %v316, %v1677
        %v1681 = vpack.c.bf16 %v1679, %v1679
        %v1682 = vpack.c.bf16 %v1680, %v1680
        %s1683 = scalar_lea.vmem %s3, 72
        %v1684 = vld [vmem:[%s1683] sm:$0xf]
        %1685 = vrot.lane.b32.xlu0 %v1671, 16
        %v1686 = vpop.permute.xlu0 %1685
        %1687 = vrot.lane.b32.xlu0 %v1672, 16
        %v1688 = vpop.permute.xlu0 %1687
        %v1689 = vsel %vm326, %v1686, %v1688
        %v1690 = vsel %vm326, %v1688, %v1686
        %v1691 = vmul.f32 %v332, %v1690
        %v1692 = vmul.f32 %v336, %v1689
        %v1693 = vpack.c.bf16 %v1691, %v1691
        %v1694 = vpack.c.bf16 %v1692, %v1692
        %s1695 = scalar_lea.vmem %s3, 76
        %v1696 = vld [vmem:[%s1695] sm:$0xf]
        %v1698 = vsel %vm343, %v1696, 0
        %v1701 = vsel %vm347, %v1693, 0
        %v1704 = vsel %vm347, %v1694, 0
        %1706 = vmatprep.subr.bf16.mxu0 %v1704
        %1707 = vmatpush1.bf16.msra.mxu0 %v1701
        %1708 = vmatprep.subr.bf16.mxu0 0
        %1709 = vmatpush1.bf16.msra.mxu0 0
        %1710 = vmatprep.subr.bf16.mxu0 0
        %1711 = vmatpush1.bf16.msra.mxu0 0
        %1712 = vmatprep.subr.bf16.mxu0 0
        %1713 = vmatpush1.bf16.msra.mxu0 0
        %1714 = vmatprep.subr.bf16.mxu0 0
        %1715 = vmatpush1.bf16.msra.mxu0 0
        %1716 = vmatprep.subr.bf16.mxu0 0
        %1717 = vmatpush1.bf16.msra.mxu0 0
        %1718 = vmatprep.subr.bf16.mxu0 0
        %1719 = vmatpush1.bf16.msra.mxu0 0
        %1720 = vmatprep.subr.bf16.mxu0 0
        %1721 = vmatpush1.bf16.msra.mxu0 0
        %1722 = vmatprep.subr.bf16.mxu0 0
        %1723 = vmatpush1.bf16.msra.mxu0 0
        %1724 = vmatprep.subr.bf16.mxu0 0
        %1725 = vmatpush1.bf16.msra.mxu0 0
        %1726 = vmatprep.subr.bf16.mxu0 0
        %1727 = vmatpush1.bf16.msra.mxu0 0
        %1728 = vmatprep.subr.bf16.mxu0 0
        %1729 = vmatpush1.bf16.msra.mxu0 0
        %1730 = vmatprep.subr.bf16.mxu0 0
        %1731 = vmatpush1.bf16.msra.mxu0 0
        %1732 = vmatprep.subr.bf16.mxu0 0
        %1733 = vmatpush1.bf16.msra.mxu0 0
        %1734 = vmatprep.subr.bf16.mxu0 0
        %1735 = vmatpush1.bf16.msra.mxu0 0
        %1736 = vmatprep.subr.bf16.mxu0 0
        %1737 = vmatpush1.bf16.msra.mxu0 0
        %1738 = vmatprep.mubr.bf16.mxu0 0
        %1739 = vmatmul.mubr.bf16.gmra.mrb[0].mxu0 %v1698
        %v1740 = vpop.f32.mrb[0].mxu0
        %v1741 = vadd.f32 0.0, %v1740
        %v1742 = vpop.f32.mrb[0].mxu0
        %v1743 = vadd.f32 0.0, %v1742
        %v1744 = vpop.f32.mrb[0].mxu0
        %v1745 = vpop.f32.mrb[0].mxu0
        %1746 = vdwg.mxu0
        %v1748 = vsel %vm343, %v1684, 0
        %v1751 = vsel %vm347, %v1681, 0
        %v1754 = vsel %vm347, %v1682, 0
        %1756 = vmatprep.subr.bf16.mxu0 %v1754
        %1757 = vmatpush1.bf16.msra.mxu0 %v1751
        %1758 = vmatprep.subr.bf16.mxu0 0
        %1759 = vmatpush1.bf16.msra.mxu0 0
        %1760 = vmatprep.subr.bf16.mxu0 0
        %1761 = vmatpush1.bf16.msra.mxu0 0
        %1762 = vmatprep.subr.bf16.mxu0 0
        %1763 = vmatpush1.bf16.msra.mxu0 0
        %1764 = vmatprep.subr.bf16.mxu0 0
        %1765 = vmatpush1.bf16.msra.mxu0 0
        %1766 = vmatprep.subr.bf16.mxu0 0
        %1767 = vmatpush1.bf16.msra.mxu0 0
        %1768 = vmatprep.subr.bf16.mxu0 0
        %1769 = vmatpush1.bf16.msra.mxu0 0
        %1770 = vmatprep.subr.bf16.mxu0 0
        %1771 = vmatpush1.bf16.msra.mxu0 0
        %1772 = vmatprep.subr.bf16.mxu0 0
        %1773 = vmatpush1.bf16.msra.mxu0 0
        %1774 = vmatprep.subr.bf16.mxu0 0
        %1775 = vmatpush1.bf16.msra.mxu0 0
        %1776 = vmatprep.subr.bf16.mxu0 0
        %1777 = vmatpush1.bf16.msra.mxu0 0
        %1778 = vmatprep.subr.bf16.mxu0 0
        %1779 = vmatpush1.bf16.msra.mxu0 0
        %1780 = vmatprep.subr.bf16.mxu0 0
        %1781 = vmatpush1.bf16.msra.mxu0 0
        %1782 = vmatprep.subr.bf16.mxu0 0
        %1783 = vmatpush1.bf16.msra.mxu0 0
        %1784 = vmatprep.subr.bf16.mxu0 0
        %1785 = vmatpush1.bf16.msra.mxu0 0
        %1786 = vmatprep.subr.bf16.mxu0 0
        %1787 = vmatpush1.bf16.msra.mxu0 0
        %1788 = vmatprep.mubr.bf16.mxu0 0
        %1789 = vmatmul.mubr.bf16.gmra.mrb[0].mxu0 %v1748
        %v1790 = vpop.f32.mrb[0].mxu0
        %v1791 = vadd.f32 %v1741, %v1790
        %v1792 = vpop.f32.mrb[0].mxu0
        %v1793 = vadd.f32 %v1743, %v1792
        %v1794 = vpop.f32.mrb[0].mxu0
        %v1795 = vpop.f32.mrb[0].mxu0
        %1796 = vdwg.mxu0
        %1797 = vrot.lane.b32.xlu0 %v1671, 15
        %v1798 = vpop.permute.xlu0 %1797
        %1799 = vrot.lane.b32.xlu0 %v1672, 15
        %v1800 = vpop.permute.xlu0 %1799
        %v1801 = vsel %vm449, %v1798, %v1800
        %v1802 = vsel %vm449, %v1800, %v1798
        %v1803 = vmul.f32 %v455, %v1802
        %v1804 = vmul.f32 %v459, %v1801
        %v1805 = vpack.c.bf16 %v1803, %v1803
        %v1806 = vpack.c.bf16 %v1804, %v1804
        %s1807 = scalar_lea.vmem %s3, 80
        %v1808 = vld [vmem:[%s1807] sm:$0xf]
        %v1810 = vsel %vm343, %v1808, 0
        %v1813 = vsel %vm347, %v1805, 0
        %v1816 = vsel %vm347, %v1806, 0
        %1818 = vmatprep.subr.bf16.mxu0 %v1816
        %1819 = vmatpush1.bf16.msra.mxu0 %v1813
        %1820 = vmatprep.subr.bf16.mxu0 0
        %1821 = vmatpush1.bf16.msra.mxu0 0
        %1822 = vmatprep.subr.bf16.mxu0 0
        %1823 = vmatpush1.bf16.msra.mxu0 0
        %1824 = vmatprep.subr.bf16.mxu0 0
        %1825 = vmatpush1.bf16.msra.mxu0 0
        %1826 = vmatprep.subr.bf16.mxu0 0
        %1827 = vmatpush1.bf16.msra.mxu0 0
        %1828 = vmatprep.subr.bf16.mxu0 0
        %1829 = vmatpush1.bf16.msra.mxu0 0
        %1830 = vmatprep.subr.bf16.mxu0 0
        %1831 = vmatpush1.bf16.msra.mxu0 0
        %1832 = vmatprep.subr.bf16.mxu0 0
        %1833 = vmatpush1.bf16.msra.mxu0 0
        %1834 = vmatprep.subr.bf16.mxu0 0
        %1835 = vmatpush1.bf16.msra.mxu0 0
        %1836 = vmatprep.subr.bf16.mxu0 0
        %1837 = vmatpush1.bf16.msra.mxu0 0
        %1838 = vmatprep.subr.bf16.mxu0 0
        %1839 = vmatpush1.bf16.msra.mxu0 0
        %1840 = vmatprep.subr.bf16.mxu0 0
        %1841 = vmatpush1.bf16.msra.mxu0 0
        %1842 = vmatprep.subr.bf16.mxu0 0
        %1843 = vmatpush1.bf16.msra.mxu0 0
        %1844 = vmatprep.subr.bf16.mxu0 0
        %1845 = vmatpush1.bf16.msra.mxu0 0
        %1846 = vmatprep.subr.bf16.mxu0 0
        %1847 = vmatpush1.bf16.msra.mxu0 0
        %1848 = vmatprep.subr.bf16.mxu0 0
        %1849 = vmatpush1.bf16.msra.mxu0 0
        %1850 = vmatprep.mubr.bf16.mxu0 0
        %1851 = vmatmul.mubr.bf16.gmra.mrb[0].mxu0 %v1810
        %v1852 = vpop.f32.mrb[0].mxu0
        %v1853 = vadd.f32 0.0, %v1852
        %v1854 = vpop.f32.mrb[0].mxu0
        %v1855 = vadd.f32 0.0, %v1854
        %v1856 = vpop.f32.mrb[0].mxu0
        %v1857 = vpop.f32.mrb[0].mxu0
        %1858 = vdwg.mxu0
        %v1859 = vadd.f32 %v1791, %v1853
        %v1860 = vadd.f32 %v1793, %v1855
        %1861 = vrot.lane.b32.xlu0 %v1671, 1
        %v1862 = vpop.permute.xlu0 %1861
        %1863 = vrot.lane.b32.xlu0 %v1672, 1
        %v1864 = vpop.permute.xlu0 %1863
        %v1865 = vsel %vm522, %v1862, %v1864
        %v1866 = vsel %vm522, %v1864, %v1862
        %v1867 = vmul.f32 %v528, %v1866
        %v1868 = vmul.f32 %v532, %v1865
        %v1869 = vpack.c.bf16 %v1867, %v1867
        %v1870 = vpack.c.bf16 %v1868, %v1868
        %s1871 = scalar_lea.vmem %s3, 84
        %v1872 = vld [vmem:[%s1871] sm:$0xf]
        %v1874 = vsel %vm343, %v1872, 0
        %v1877 = vsel %vm347, %v1869, 0
        %v1880 = vsel %vm347, %v1870, 0
        %1882 = vmatprep.subr.bf16.mxu0 %v1880
        %1883 = vmatpush1.bf16.msra.mxu0 %v1877
        %1884 = vmatprep.subr.bf16.mxu0 0
        %1885 = vmatpush1.bf16.msra.mxu0 0
        %1886 = vmatprep.subr.bf16.mxu0 0
        %1887 = vmatpush1.bf16.msra.mxu0 0
        %1888 = vmatprep.subr.bf16.mxu0 0
        %1889 = vmatpush1.bf16.msra.mxu0 0
        %1890 = vmatprep.subr.bf16.mxu0 0
        %1891 = vmatpush1.bf16.msra.mxu0 0
        %1892 = vmatprep.subr.bf16.mxu0 0
        %1893 = vmatpush1.bf16.msra.mxu0 0
        %1894 = vmatprep.subr.bf16.mxu0 0
        %1895 = vmatpush1.bf16.msra.mxu0 0
        %1896 = vmatprep.subr.bf16.mxu0 0
        %1897 = vmatpush1.bf16.msra.mxu0 0
        %1898 = vmatprep.subr.bf16.mxu0 0
        %1899 = vmatpush1.bf16.msra.mxu0 0
        %1900 = vmatprep.subr.bf16.mxu0 0
        %1901 = vmatpush1.bf16.msra.mxu0 0
        %1902 = vmatprep.subr.bf16.mxu0 0
        %1903 = vmatpush1.bf16.msra.mxu0 0
        %1904 = vmatprep.subr.bf16.mxu0 0
        %1905 = vmatpush1.bf16.msra.mxu0 0
        %1906 = vmatprep.subr.bf16.mxu0 0
        %1907 = vmatpush1.bf16.msra.mxu0 0
        %1908 = vmatprep.subr.bf16.mxu0 0
        %1909 = vmatpush1.bf16.msra.mxu0 0
        %1910 = vmatprep.subr.bf16.mxu0 0
        %1911 = vmatpush1.bf16.msra.mxu0 0
        %1912 = vmatprep.subr.bf16.mxu0 0
        %1913 = vmatpush1.bf16.msra.mxu0 0
        %1914 = vmatprep.mubr.bf16.mxu0 0
        %1915 = vmatmul.mubr.bf16.gmra.mrb[0].mxu0 %v1874
        %v1916 = vpop.f32.mrb[0].mxu0
        %v1917 = vadd.f32 0.0, %v1916
        %v1918 = vpop.f32.mrb[0].mxu0
        %v1919 = vadd.f32 0.0, %v1918
        %v1920 = vpop.f32.mrb[0].mxu0
        %v1921 = vpop.f32.mrb[0].mxu0
        %1922 = vdwg.mxu0
        %v1923 = vadd.f32 %v1859, %v1917
        %v1924 = vadd.f32 %v1860, %v1919
        %v1925 = vmul.f32 %v594, %v1671
        %v1926 = vmul.f32 %v598, %v1672
        %v1927 = vpack.c.bf16 %v1925, %v1925
        %v1928 = vpack.c.bf16 %v1926, %v1926
        %s1929 = scalar_lea.vmem %s3, 88
        %v1930 = vld [vmem:[%s1929] sm:$0xf]
        %v1932 = vsel %vm343, %v1930, 0
        %v1935 = vsel %vm347, %v1927, 0
        %v1938 = vsel %vm347, %v1928, 0
        %1940 = vmatprep.subr.bf16.mxu0 %v1938
        %1941 = vmatpush1.bf16.msra.mxu0 %v1935
        %1942 = vmatprep.subr.bf16.mxu0 0
        %1943 = vmatpush1.bf16.msra.mxu0 0
        %1944 = vmatprep.subr.bf16.mxu0 0
        %1945 = vmatpush1.bf16.msra.mxu0 0
        %1946 = vmatprep.subr.bf16.mxu0 0
        %1947 = vmatpush1.bf16.msra.mxu0 0
        %1948 = vmatprep.subr.bf16.mxu0 0
        %1949 = vmatpush1.bf16.msra.mxu0 0
        %1950 = vmatprep.subr.bf16.mxu0 0
        %1951 = vmatpush1.bf16.msra.mxu0 0
        %1952 = vmatprep.subr.bf16.mxu0 0
        %1953 = vmatpush1.bf16.msra.mxu0 0
        %1954 = vmatprep.subr.bf16.mxu0 0
        %1955 = vmatpush1.bf16.msra.mxu0 0
        %1956 = vmatprep.subr.bf16.mxu0 0
        %1957 = vmatpush1.bf16.msra.mxu0 0
        %1958 = vmatprep.subr.bf16.mxu0 0
        %1959 = vmatpush1.bf16.msra.mxu0 0
        %1960 = vmatprep.subr.bf16.mxu0 0
        %1961 = vmatpush1.bf16.msra.mxu0 0
        %1962 = vmatprep.subr.bf16.mxu0 0
        %1963 = vmatpush1.bf16.msra.mxu0 0
        %1964 = vmatprep.subr.bf16.mxu0 0
        %1965 = vmatpush1.bf16.msra.mxu0 0
        %1966 = vmatprep.subr.bf16.mxu0 0
        %1967 = vmatpush1.bf16.msra.mxu0 0
        %1968 = vmatprep.subr.bf16.mxu0 0
        %1969 = vmatpush1.bf16.msra.mxu0 0
        %1970 = vmatprep.subr.bf16.mxu0 0
        %1971 = vmatpush1.bf16.msra.mxu0 0
        %1972 = vmatprep.mubr.bf16.mxu0 0
        %1973 = vmatmul.mubr.bf16.gmra.mrb[0].mxu0 %v1932
        %v1974 = vpop.f32.mrb[0].mxu0
        %v1975 = vadd.f32 0.0, %v1974
        %v1976 = vpop.f32.mrb[0].mxu0
        %v1977 = vadd.f32 0.0, %v1976
        %v1978 = vpop.f32.mrb[0].mxu0
        %v1979 = vpop.f32.mrb[0].mxu0
        %1980 = vdwg.mxu0
        %v1981 = vadd.f32 %v1923, %v1975
        %v1982 = vadd.f32 %v1924, %v1977
        %1983 = vrot.lane.b32.xlu0 %v1671, 127
        %v1984 = vpop.permute.xlu0 %1983
        %1985 = vrot.lane.b32.xlu0 %v1672, 127
        %v1986 = vpop.permute.xlu0 %1985
        %v1987 = vsel %vm661, %v1984, %v1986
        %v1988 = vsel %vm661, %v1986, %v1984
        %v1989 = vmul.f32 %v667, %v1987
        %v1990 = vmul.f32 %v671, %v1988
        %v1991 = vpack.c.bf16 %v1989, %v1989
        %v1992 = vpack.c.bf16 %v1990, %v1990
        %s1993 = scalar_lea.vmem %s3, 92
        %v1994 = vld [vmem:[%s1993] sm:$0xf]
        %v1996 = vsel %vm343, %v1994, 0
        %v1999 = vsel %vm347, %v1991, 0
        %v2002 = vsel %vm347, %v1992, 0
        %2004 = vmatprep.subr.bf16.mxu0 %v2002
        %2005 = vmatpush1.bf16.msra.mxu0 %v1999
        %2006 = vmatprep.subr.bf16.mxu0 0
        %2007 = vmatpush1.bf16.msra.mxu0 0
        %2008 = vmatprep.subr.bf16.mxu0 0
        %2009 = vmatpush1.bf16.msra.mxu0 0
        %2010 = vmatprep.subr.bf16.mxu0 0
        %2011 = vmatpush1.bf16.msra.mxu0 0
        %2012 = vmatprep.subr.bf16.mxu0 0
        %2013 = vmatpush1.bf16.msra.mxu0 0
        %2014 = vmatprep.subr.bf16.mxu0 0
        %2015 = vmatpush1.bf16.msra.mxu0 0
        %2016 = vmatprep.subr.bf16.mxu0 0
        %2017 = vmatpush1.bf16.msra.mxu0 0
        %2018 = vmatprep.subr.bf16.mxu0 0
        %2019 = vmatpush1.bf16.msra.mxu0 0
        %2020 = vmatprep.subr.bf16.mxu0 0
        %2021 = vmatpush1.bf16.msra.mxu0 0
        %2022 = vmatprep.subr.bf16.mxu0 0
        %2023 = vmatpush1.bf16.msra.mxu0 0
        %2024 = vmatprep.subr.bf16.mxu0 0
        %2025 = vmatpush1.bf16.msra.mxu0 0
        %2026 = vmatprep.subr.bf16.mxu0 0
        %2027 = vmatpush1.bf16.msra.mxu0 0
        %2028 = vmatprep.subr.bf16.mxu0 0
        %2029 = vmatpush1.bf16.msra.mxu0 0
        %2030 = vmatprep.subr.bf16.mxu0 0
        %2031 = vmatpush1.bf16.msra.mxu0 0
        %2032 = vmatprep.subr.bf16.mxu0 0
        %2033 = vmatpush1.bf16.msra.mxu0 0
        %2034 = vmatprep.subr.bf16.mxu0 0
        %2035 = vmatpush1.bf16.msra.mxu0 0
        %2036 = vmatprep.mubr.bf16.mxu0 0
        %2037 = vmatmul.mubr.bf16.gmra.mrb[0].mxu0 %v1996
        %v2038 = vpop.f32.mrb[0].mxu0
        %v2039 = vadd.f32 0.0, %v2038
        %v2040 = vpop.f32.mrb[0].mxu0
        %v2041 = vadd.f32 0.0, %v2040
        %v2042 = vpop.f32.mrb[0].mxu0
        %v2043 = vpop.f32.mrb[0].mxu0
        %2044 = vdwg.mxu0
        %v2045 = vadd.f32 %v1981, %v2039
        %v2046 = vadd.f32 %v1982, %v2041
        %2047 = vrot.lane.b32.xlu0 %v1671, 113
        %v2048 = vpop.permute.xlu0 %2047
        %2049 = vrot.lane.b32.xlu0 %v1672, 113
        %v2050 = vpop.permute.xlu0 %2049
        %v2051 = vsel %vm734, %v2048, %v2050
        %v2052 = vsel %vm734, %v2050, %v2048
        %v2053 = vmul.f32 %v740, %v2051
        %v2054 = vmul.f32 %v744, %v2052
        %v2055 = vpack.c.bf16 %v2053, %v2053
        %v2056 = vpack.c.bf16 %v2054, %v2054
        %s2057 = scalar_lea.vmem %s3, 96
        %v2058 = vld [vmem:[%s2057] sm:$0xf]
        %v2060 = vsel %vm343, %v2058, 0
        %v2063 = vsel %vm347, %v2055, 0
        %v2066 = vsel %vm347, %v2056, 0
        %2068 = vmatprep.subr.bf16.mxu0 %v2066
        %2069 = vmatpush1.bf16.msra.mxu0 %v2063
        %2070 = vmatprep.subr.bf16.mxu0 0
        %2071 = vmatpush1.bf16.msra.mxu0 0
        %2072 = vmatprep.subr.bf16.mxu0 0
        %2073 = vmatpush1.bf16.msra.mxu0 0
        %2074 = vmatprep.subr.bf16.mxu0 0
        %2075 = vmatpush1.bf16.msra.mxu0 0
        %2076 = vmatprep.subr.bf16.mxu0 0
        %2077 = vmatpush1.bf16.msra.mxu0 0
        %2078 = vmatprep.subr.bf16.mxu0 0
        %2079 = vmatpush1.bf16.msra.mxu0 0
        %2080 = vmatprep.subr.bf16.mxu0 0
        %2081 = vmatpush1.bf16.msra.mxu0 0
        %2082 = vmatprep.subr.bf16.mxu0 0
        %2083 = vmatpush1.bf16.msra.mxu0 0
        %2084 = vmatprep.subr.bf16.mxu0 0
        %2085 = vmatpush1.bf16.msra.mxu0 0
        %2086 = vmatprep.subr.bf16.mxu0 0
        %2087 = vmatpush1.bf16.msra.mxu0 0
        %2088 = vmatprep.subr.bf16.mxu0 0
        %2089 = vmatpush1.bf16.msra.mxu0 0
        %2090 = vmatprep.subr.bf16.mxu0 0
        %2091 = vmatpush1.bf16.msra.mxu0 0
        %2092 = vmatprep.subr.bf16.mxu0 0
        %2093 = vmatpush1.bf16.msra.mxu0 0
        %2094 = vmatprep.subr.bf16.mxu0 0
        %2095 = vmatpush1.bf16.msra.mxu0 0
        %2096 = vmatprep.subr.bf16.mxu0 0
        %2097 = vmatpush1.bf16.msra.mxu0 0
        %2098 = vmatprep.subr.bf16.mxu0 0
        %2099 = vmatpush1.bf16.msra.mxu0 0
        %2100 = vmatprep.mubr.bf16.mxu0 0
        %2101 = vmatmul.mubr.bf16.gmra.mrb[0].mxu0 %v2060
        %v2102 = vpop.f32.mrb[0].mxu0
        %v2103 = vadd.f32 0.0, %v2102
        %v2104 = vpop.f32.mrb[0].mxu0
        %v2105 = vadd.f32 0.0, %v2104
        %v2106 = vpop.f32.mrb[0].mxu0
        %v2107 = vpop.f32.mrb[0].mxu0
        %2108 = vdwg.mxu0
        %v2109 = vadd.f32 %v2045, %v2103
        %v2110 = vadd.f32 %v2046, %v2105
        %2111 = vrot.lane.b32.xlu0 %v1671, 112
        %v2112 = vpop.permute.xlu0 %2111
        %2113 = vrot.lane.b32.xlu0 %v1672, 112
        %v2114 = vpop.permute.xlu0 %2113
        %v2115 = vsel %vm807, %v2112, %v2114
        %v2116 = vsel %vm807, %v2114, %v2112
        %v2117 = vmul.f32 %v813, %v2115
        %v2118 = vmul.f32 %v817, %v2116
        %v2119 = vpack.c.bf16 %v2117, %v2117
        %v2120 = vpack.c.bf16 %v2118, %v2118
        %s2121 = scalar_lea.vmem %s3, 100
        %v2122 = vld [vmem:[%s2121] sm:$0xf]
        %v2124 = vsel %vm343, %v2122, 0
        %v2127 = vsel %vm347, %v2119, 0
        %v2130 = vsel %vm347, %v2120, 0
        %2132 = vmatprep.subr.bf16.mxu0 %v2130
        %2133 = vmatpush1.bf16.msra.mxu0 %v2127
        %2134 = vmatprep.subr.bf16.mxu0 0
        %2135 = vmatpush1.bf16.msra.mxu0 0
        %2136 = vmatprep.subr.bf16.mxu0 0
        %2137 = vmatpush1.bf16.msra.mxu0 0
        %2138 = vmatprep.subr.bf16.mxu0 0
        %2139 = vmatpush1.bf16.msra.mxu0 0
        %2140 = vmatprep.subr.bf16.mxu0 0
        %2141 = vmatpush1.bf16.msra.mxu0 0
        %2142 = vmatprep.subr.bf16.mxu0 0
        %2143 = vmatpush1.bf16.msra.mxu0 0
        %2144 = vmatprep.subr.bf16.mxu0 0
        %2145 = vmatpush1.bf16.msra.mxu0 0
        %2146 = vmatprep.subr.bf16.mxu0 0
        %2147 = vmatpush1.bf16.msra.mxu0 0
        %2148 = vmatprep.subr.bf16.mxu0 0
        %2149 = vmatpush1.bf16.msra.mxu0 0
        %2150 = vmatprep.subr.bf16.mxu0 0
        %2151 = vmatpush1.bf16.msra.mxu0 0
        %2152 = vmatprep.subr.bf16.mxu0 0
        %2153 = vmatpush1.bf16.msra.mxu0 0
        %2154 = vmatprep.subr.bf16.mxu0 0
        %2155 = vmatpush1.bf16.msra.mxu0 0
        %2156 = vmatprep.subr.bf16.mxu0 0
        %2157 = vmatpush1.bf16.msra.mxu0 0
        %2158 = vmatprep.subr.bf16.mxu0 0
        %2159 = vmatpush1.bf16.msra.mxu0 0
        %2160 = vmatprep.subr.bf16.mxu0 0
        %2161 = vmatpush1.bf16.msra.mxu0 0
        %2162 = vmatprep.subr.bf16.mxu0 0
        %2163 = vmatpush1.bf16.msra.mxu0 0
        %2164 = vmatprep.mubr.bf16.mxu0 0
        %2165 = vmatmul.mubr.bf16.gmra.mrb[0].mxu0 %v2124
        %v2166 = vpop.f32.mrb[0].mxu0
        %v2167 = vadd.f32 0.0, %v2166
        %v2168 = vpop.f32.mrb[0].mxu0
        %v2169 = vadd.f32 0.0, %v2168
        %v2170 = vpop.f32.mrb[0].mxu0
        %v2171 = vpop.f32.mrb[0].mxu0
        %2172 = vdwg.mxu0
        %v2173 = vadd.f32 %v2109, %v2167
        %v2174 = vadd.f32 %v2110, %v2169
        %2175 = vrot.lane.b32.xlu0 %v1671, 111
        %v2176 = vpop.permute.xlu0 %2175
        %2177 = vrot.lane.b32.xlu0 %v1672, 111
        %v2178 = vpop.permute.xlu0 %2177
        %v2179 = vsel %vm880, %v2176, %v2178
        %v2180 = vsel %vm880, %v2178, %v2176
        %v2181 = vmul.f32 %v886, %v2179
        %v2182 = vmul.f32 %v890, %v2180
        %v2183 = vpack.c.bf16 %v2181, %v2181
        %v2184 = vpack.c.bf16 %v2182, %v2182
        %s2185 = scalar_lea.vmem %s3, 104
        %v2186 = vld [vmem:[%s2185] sm:$0xf]
        %v2188 = vsel %vm343, %v2186, 0
        %v2191 = vsel %vm347, %v2183, 0
        %v2194 = vsel %vm347, %v2184, 0
        %2196 = vmatprep.subr.bf16.mxu0 %v2194
        %2197 = vmatpush1.bf16.msra.mxu0 %v2191
        %2198 = vmatprep.subr.bf16.mxu0 0
        %2199 = vmatpush1.bf16.msra.mxu0 0
        %2200 = vmatprep.subr.bf16.mxu0 0
        %2201 = vmatpush1.bf16.msra.mxu0 0
        %2202 = vmatprep.subr.bf16.mxu0 0
        %2203 = vmatpush1.bf16.msra.mxu0 0
        %2204 = vmatprep.subr.bf16.mxu0 0
        %2205 = vmatpush1.bf16.msra.mxu0 0
        %2206 = vmatprep.subr.bf16.mxu0 0
        %2207 = vmatpush1.bf16.msra.mxu0 0
        %2208 = vmatprep.subr.bf16.mxu0 0
        %2209 = vmatpush1.bf16.msra.mxu0 0
        %2210 = vmatprep.subr.bf16.mxu0 0
        %2211 = vmatpush1.bf16.msra.mxu0 0
        %2212 = vmatprep.subr.bf16.mxu0 0
        %2213 = vmatpush1.bf16.msra.mxu0 0
        %2214 = vmatprep.subr.bf16.mxu0 0
        %2215 = vmatpush1.bf16.msra.mxu0 0
        %2216 = vmatprep.subr.bf16.mxu0 0
        %2217 = vmatpush1.bf16.msra.mxu0 0
        %2218 = vmatprep.subr.bf16.mxu0 0
        %2219 = vmatpush1.bf16.msra.mxu0 0
        %2220 = vmatprep.subr.bf16.mxu0 0
        %2221 = vmatpush1.bf16.msra.mxu0 0
        %2222 = vmatprep.subr.bf16.mxu0 0
        %2223 = vmatpush1.bf16.msra.mxu0 0
        %2224 = vmatprep.subr.bf16.mxu0 0
        %2225 = vmatpush1.bf16.msra.mxu0 0
        %2226 = vmatprep.subr.bf16.mxu0 0
        %2227 = vmatpush1.bf16.msra.mxu0 0
        %2228 = vmatprep.mubr.bf16.mxu0 0
        %2229 = vmatmul.mubr.bf16.gmra.mrb[0].mxu0 %v2188
        %v2230 = vpop.f32.mrb[0].mxu0
        %v2231 = vadd.f32 0.0, %v2230
        %v2232 = vpop.f32.mrb[0].mxu0
        %v2233 = vadd.f32 0.0, %v2232
        %v2234 = vpop.f32.mrb[0].mxu0
        %v2235 = vpop.f32.mrb[0].mxu0
        %2236 = vdwg.mxu0
        %v2237 = vadd.f32 %v2173, %v2231
        %v2238 = vadd.f32 %v2174, %v2233
        %2240 = vset.pattern.permute.xlu0 0
        %2241 = vperm.xlu0 %2240, %v235
        %v2242 = vpop.permute.xlu0 %2241
        %v2243 = vrot.slane %v1617, 4
        %v2244 = vrot.slane %v2242, 4
        %v2245 = vsel %vm248, %v2243, %v2244
        %v2247 = vadd.f32 %v2237, %v2245
        %v2248 = vadd.f32 %v2238, %v2245
        %v2249 = vmul.f32 %v2247, 0.1
        %v2250 = vmul.f32 %v2248, 0.1
        %v2251 = vmax.f32 %v2247, %v2249
        %v2252 = vmax.f32 %v2248, %v2250
        %v2253 = vadd.f32 %v1608, %v2251
        %v2254 = vadd.f32 %v1609, %v2252
        %2255 = vst [vmem:[%s217] sm:$0xff] %v2253
        %2256 = vst [vmem:[%s217 + $0x8] sm:$0xff] %v2254
        %s2257 = sand.u32 %s137, 1
        %s2258 = scalar_lea.sflag [#allocation3], %s2257
        %s2259 = sand.u32 %s137, 1
        %s2260 = smul.addr %s2259, 16
        %s2261 = scalar_lea.vmem [#allocation2], %s2260
        // Predicated region
        $region41: #{tpu_custom_call.1} parent=39 // pred_check
          %p2262 = pneg %p147
        $region42: #{tpu_custom_call.1} parent=39 // pred_check_branch
          %2264 = sbr.rel (%p2262) target = $region44
        $region43: #{tpu_custom_call.1} parent=39 // pred_region
          %s2266 = ssub.s32 256, 256
          %2267 = vsyncadd %s2258, %s2266
          %s2268 = smul.addr %s19, 2
          %s2269 = smul.addr %s2268, 128
          %s2270 = scalar_lea.hbm %s5, %s2269
          %s2272 = sshll.u32 %s2261, 4
          %s2273 = int_to_ptr.vmem [resolvable:$true] %s2272
          %2275 = dma.vmem_to_hbm [thread:$0]  %s2273, 256, %s2270, %s2258
        $region44: #{tpu_custom_call.1} parent=39 // pred_fallthru
          _
      $region40: #{tpu_custom_call.1} parent=5 // pred_fallthru
        _
      %p2276 = scmp.le.s32.totalorder 2, %s14
      // Predicated region
      $region45: #{tpu_custom_call.1} parent=5 // pred_check
        %p2277 = pneg %p2276
      $region46: #{tpu_custom_call.1} parent=5 // pred_check_branch
        %2279 = sbr.rel (%p2277) target = $region48
      $region47: #{tpu_custom_call.1} parent=5 // pred_region
        %s2280 = ssub.s32 %s14, 2
        // Predicated region
        $region49: #{tpu_custom_call.1} parent=47 // pred_check
          %p2281 = pneg %p153
        $region50: #{tpu_custom_call.1} parent=47 // pred_check_branch
          %2283 = sbr.rel (%p2281) target = $region52
        $region51: #{tpu_custom_call.1} parent=47 // pred_region
          %s2284 = sand.u32 %s138, 1
          %s2285 = scalar_lea.sflag [#allocation3], %s2284
          %s2286 = sand.u32 %s138, 1
          %s2287 = smul.addr %s2286, 16
          %s2288 = scalar_lea.vmem [#allocation2], %s2287
          %2289 = dma.done %s2285, 256
        $region52: #{tpu_custom_call.1} parent=47 // pred_fallthru
          _
      $region48: #{tpu_custom_call.1} parent=5 // pred_fallthru
        _
    $region6: #{tpu_custom_call.1} parent=1 // loop_footer
      %s18 = sadd.s32 1, %s14
    $region7: #{tpu_custom_call.1} parent=1 // loop_footer_branch
      %13 = sbr.rel target = $region3
    $region8: #{tpu_custom_call.1} parent=1 // loop_exit
      _
    %2290 = vsyncpa [#allocation3], 1
    %s2291 = scalar_lea.sflag [#allocation3], 1
    %2292 = vsyncpa %s2291, 1

</llo_original>
